<compile_context>
chip_gen: v6e
topology: v6e:2x2x1
jax: 0.10.0
libtpu: 0.0.40
codegen_flags: <defaults>
</compile_context>

<pallas_src>
import numpy as np
import jax
import jax.numpy as jnp
from jax import lax
from jax.experimental import pallas as pl
from jax.experimental.pallas import tpu as pltpu


# ------------------- Fused kernel: conv + ReLU + Hebbian delta + weight update + lateral -------------------
def _make_fused_kernel(B, N, C):
    inv_c = 0.001 / C

    def kernel(patches_ref, wmat_ref, bias_ref, wlat_ref, out_ref, wout_ref, act_s):
        # patches_ref: (B, K, N)   wmat_ref: (C, K)   bias_ref: (C, 1)   wlat_ref: (C, N, N)
        # out_ref:     (B, C, N)   wout_ref: (C, N, N)                   act_s: VMEM (C, B, N)
        wmat = wmat_ref[...]
        bias = bias_ref[...]

        # --- conv (channel-major im2col matmul) + bias + ReLU, and Hebbian delta ---------------
        delta = None
        for b in range(B):                                   # B is a tiny compile-time constant
            a_b = jnp.maximum(
                jnp.dot(wmat, patches_ref[b], preferred_element_type=jnp.float32) + bias,
                0.0)                                         # (C, N), lane-dense
            act_s[:, b, :] = a_b                             # stage activations as (C, B, N)
            g = lax.dot_general(a_b, a_b, (((0,), (0,)), ((), ())),
                                preferred_element_type=jnp.float32)   # (N, N), summed over C
            delta = g if delta is None else delta + g
        delta = delta * inv_c                                # 0.001/C * sum_{b,c} a_i a_j

        # --- lateral-weight update: one bulk clip + one bulk (aliased) store --------------------
        w_new = jnp.clip(wlat_ref[...] + delta[None, :, :], -1.0, 1.0)   # (C, N, N)
        wout_ref[...] = w_new

        # --- lateral interaction: ONE C-batched matmul, then act += lateral ---------------------
        act3 = act_s[...]                                                 # (C, B, N)
        lat3 = lax.dot_general(act3, w_new, (((2,), (1,)), ((0,), (0,))),
                               preferred_element_type=jnp.float32)        # (C, B, N)
        act_s[...] = act3 + lat3
        for b in range(B):                        # emit (B, C, N) without a value-level transpose
            out_ref[b] = act_s[:, b, :]

    return kernel


def fused_hebbian_call(patches, wmat, bias, lateral_w, B, N, C, K):
    out_bcn, w_new = pl.pallas_call(
        _make_fused_kernel(B, N, C),
        out_shape=(
            jax.ShapeDtypeStruct((B, C, N), jnp.float32),
            jax.ShapeDtypeStruct((C, N, N), jnp.float32),
        ),
        grid=(1,),
        in_specs=[
            pl.BlockSpec((B, K, N), lambda i: (0, 0, 0)),
            pl.BlockSpec((C, K), lambda i: (0, 0)),
            pl.BlockSpec((C, 1), lambda i: (0, 0)),
            pl.BlockSpec((C, N, N), lambda i: (0, 0, 0)),
        ],
        out_specs=(
            pl.BlockSpec((B, C, N), lambda i: (0, 0, 0)),
            pl.BlockSpec((C, N, N), lambda i: (0, 0, 0)),
        ),
        scratch_shapes=[pltpu.VMEM((C, B, N), jnp.float32)],
        input_output_aliases={3: 1},              # lateral_w -> updated lateral weights
        compiler_params=pltpu.CompilerParams(
            dimension_semantics=("arbitrary",),
            allow_input_fusion=[True, False, False, False],   # fuse the im2col producer
        ),
    )(patches, wmat, bias, lateral_w)
    return out_bcn, w_new


# ------------------- Forward (glue: im2col assembly only) --------------------------------------------------
def hebbian_encoder_forward(x, conv_w, conv_b, lateral_w):
    B, C_in, H, W = x.shape
    C = conv_w.shape[0]
    H_out = (H + 2 - 3) // 2 + 1
    W_out = (W + 2 - 3) // 2 + 1
    N = H_out * W_out
    K = C_in * 9

    # im2col patch extraction (layout plumbing only; all compute is in the Pallas kernel)
    x_pad = jnp.pad(x, ((0, 0), (0, 0), (1, 1), (1, 1)))
    cols = [x_pad[:, :, kh:kh + 2 * H_out:2, kw:kw + 2 * W_out:2]
            for kh in range(3) for kw in range(3)]
    patches = jnp.stack(cols, axis=2).reshape(B, K, N)   # (B, C_in*9, N); feature order (ci, kh, kw)
    wmat = conv_w.reshape(C, K)                          # (C, K) — channel-major, no transpose
    bias = conv_b.reshape(C, 1)

    out_bcn, w_new = fused_hebbian_call(patches, wmat, bias, lateral_w, B, N, C, K)
    return out_bcn.reshape(B, C, H_out, W_out), w_new


# ------------------- Pure-JAX reference for correctness ----------------------------------------------------
def reference_forward(x, conv_w, conv_b, lateral_w):
    out = jax.lax.conv_general_dilated(
        x, conv_w, window_strides=(2, 2), padding=((1, 1), (1, 1)),
        dimension_numbers=("NCHW", "OIHW", "NCHW"))
    act = jax.nn.relu(out + conv_b[None, :, None, None])
    B, C, H, W = act.shape
    act_flat = act.reshape(B, C, -1)
    hebbian = jnp.einsum("bni,bnj->nij", act_flat, act_flat)
    delta = 0.001 * hebbian.mean(axis=0)
    w_new = jnp.clip(lateral_w + delta, -1.0, 1.0)
    lateral = jnp.einsum("bci,cij->bcj", act_flat, w_new)
    return act + lateral.reshape(B, C, H, W), w_new


if __name__ == "__main__":
    key = jax.random.PRNGKey(0)
    k1, k2, k3, k4 = jax.random.split(key, 4)

    B, C_in, H, W = 2, 4, 16, 16
    C_out = 8
    H_out = W_out = 8                     # conv3x3, stride 2, pad 1
    N = H_out * W_out

    x = jax.random.normal(k1, (B, C_in, H, W), dtype=jnp.float32)
    conv_w = 0.1 * jax.random.normal(k2, (C_out, C_in, 3, 3), dtype=jnp.float32)
    conv_b = 0.05 * jax.random.normal(k3, (C_out,), dtype=jnp.float32)
    # Module spec inits lateral_weights to zeros; random values here so the clamp and
    # lateral-matmul paths are actually exercised by the correctness check.
    lateral_w = 0.8 * jax.random.normal(k4, (C_out, N, N), dtype=jnp.float32)

    fwd = jax.jit(hebbian_encoder_forward)
    out, w_new = fwd(x, conv_w, conv_b, lateral_w)
    jax.block_until_ready((out, w_new))

    ref_out, ref_w = reference_forward(x, conv_w, conv_b, lateral_w)
    np.testing.assert_allclose(np.asarray(out), np.asarray(ref_out), rtol=1e-3, atol=1e-3)
    np.testing.assert_allclose(np.asarray(w_new), np.asarray(ref_w), rtol=1e-3, atol=1e-3)

    print("KERNEL_OK")
</pallas_src>

<mosaic_0001>
module attributes {stable_mosaic.version = 11 : i64} {
  func.func @kernel(%arg0: i32, %arg1: memref<2x36x64xf32, #tpu.memory_space<vmem>>, %arg2: memref<8x36xf32, #tpu.memory_space<vmem>>, %arg3: memref<8x1xf32, #tpu.memory_space<vmem>>, %arg4: memref<8x64x64xf32, #tpu.memory_space<vmem>>, %arg5: memref<2x8x64xf32, #tpu.memory_space<vmem>>, %arg6: memref<8x64x64xf32, #tpu.memory_space<vmem>>, %arg7: memref<8x2x64xf32, #tpu.memory_space<vmem>>) attributes {dimension_semantics = [#tpu.dimension_semantics<arbitrary>], iteration_bounds = array<i64: 1>, scalar_prefetch = 0 : i64, scratch_operands = 1 : i64, tpu.core_type = #tpu.core_type<tc>, window_params = [{pipeline_mode = #tpu.pipeline_mode<synchronous>, transform_indices = @transform_0, window_bounds = array<i64: 2, 36, 64>}, {pipeline_mode = #tpu.pipeline_mode<synchronous>, transform_indices = @transform_1, window_bounds = array<i64: 8, 36>}, {pipeline_mode = #tpu.pipeline_mode<synchronous>, transform_indices = @transform_2, window_bounds = array<i64: 8, 1>}, {pipeline_mode = #tpu.pipeline_mode<synchronous>, transform_indices = @transform_3, window_bounds = array<i64: 8, 64, 64>}, {pipeline_mode = #tpu.pipeline_mode<synchronous>, transform_indices = @transform_4, window_bounds = array<i64: 2, 8, 64>}, {pipeline_mode = #tpu.pipeline_mode<synchronous>, transform_indices = @transform_5, window_bounds = array<i64: 8, 64, 64>}]} {
    %c0 = arith.constant 0 : index
    %c0_0 = arith.constant 0 : index
    %0 = vector.load %arg2[%c0, %c0_0] : memref<8x36xf32, #tpu.memory_space<vmem>>, vector<8x36xf32>
    %c0_1 = arith.constant 0 : index
    %c0_2 = arith.constant 0 : index
    %1 = vector.load %arg3[%c0_1, %c0_2] : memref<8x1xf32, #tpu.memory_space<vmem>>, vector<8x1xf32>
    %c0_3 = arith.constant 0 : index
    %c0_4 = arith.constant 0 : index
    %c0_5 = arith.constant 0 : index
    %2 = vector.load %arg1[%c0_3, %c0_4, %c0_5] : memref<2x36x64xf32, #tpu.memory_space<vmem>>, vector<1x36x64xf32>
    %3 = vector.shape_cast %2 : vector<1x36x64xf32> to vector<36x64xf32>
    %cst = arith.constant dense<0.000000e+00> : vector<8x64xf32>
    %4 = tpu.matmul %0, %3, %cst {dimension_numbers = #tpu.dot_dimension_numbers<[1], [0], [0], [1], [0, 0, 1, 1], [], []>} : vector<8x36xf32>, vector<36x64xf32>, vector<8x64xf32> -> vector<8x64xf32>
    %5 = vector.broadcast %1 : vector<8x1xf32> to vector<8x64xf32>
    %6 = arith.addf %4, %5 : vector<8x64xf32>
    %cst_6 = arith.constant 0.000000e+00 : f32
    %7 = vector.broadcast %cst_6 : f32 to vector<8x64xf32>
    %8 = arith.maximumf %6, %7 : vector<8x64xf32>
    %c0_7 = arith.constant 0 : index
    %c0_8 = arith.constant 0 : index
    %c0_9 = arith.constant 0 : index
    %9 = vector.load %arg7[%c0_7, %c0_8, %c0_9] : memref<8x2x64xf32, #tpu.memory_space<vmem>>, vector<8x1x64xf32>
    %10 = vector.shape_cast %9 : vector<8x1x64xf32> to vector<8x64xf32>
    %11 = vector.shape_cast %8 : vector<8x64xf32> to vector<8x1x64xf32>
    tpu.vector_store %arg7[%c0_7, %c0_8, %c0_9], %11 {strides = array<i32>} : memref<8x2x64xf32, #tpu.memory_space<vmem>>, vector<8x1x64xf32>,
    %cst_10 = arith.constant dense<0.000000e+00> : vector<64x64xf32>
    %12 = tpu.matmul %8, %8, %cst_10 {dimension_numbers = #tpu.dot_dimension_numbers<[0], [0], [1], [1], [0, 1, 1, 1], [], []>} : vector<8x64xf32>, vector<8x64xf32>, vector<64x64xf32> -> vector<64x64xf32>
    %c1 = arith.constant 1 : index
    %c0_11 = arith.constant 0 : index
    %c0_12 = arith.constant 0 : index
    %13 = vector.load %arg1[%c1, %c0_11, %c0_12] : memref<2x36x64xf32, #tpu.memory_space<vmem>>, vector<1x36x64xf32>
    %14 = vector.shape_cast %13 : vector<1x36x64xf32> to vector<36x64xf32>
    %cst_13 = arith.constant dense<0.000000e+00> : vector<8x64xf32>
    %15 = tpu.matmul %0, %14, %cst_13 {dimension_numbers = #tpu.dot_dimension_numbers<[1], [0], [0], [1], [0, 0, 1, 1], [], []>} : vector<8x36xf32>, vector<36x64xf32>, vector<8x64xf32> -> vector<8x64xf32>
    %16 = vector.broadcast %1 : vector<8x1xf32> to vector<8x64xf32>
    %17 = arith.addf %15, %16 : vector<8x64xf32>
    %cst_14 = arith.constant 0.000000e+00 : f32
    %18 = vector.broadcast %cst_14 : f32 to vector<8x64xf32>
    %19 = arith.maximumf %17, %18 : vector<8x64xf32>
    %c0_15 = arith.constant 0 : index
    %c1_16 = arith.constant 1 : index
    %c0_17 = arith.constant 0 : index
    %20 = vector.load %arg7[%c0_15, %c1_16, %c0_17] : memref<8x2x64xf32, #tpu.memory_space<vmem>>, vector<8x1x64xf32>
    %21 = vector.shape_cast %20 : vector<8x1x64xf32> to vector<8x64xf32>
    %22 = vector.shape_cast %19 : vector<8x64xf32> to vector<8x1x64xf32>
    tpu.vector_store %arg7[%c0_15, %c1_16, %c0_17], %22 {strides = array<i32>} : memref<8x2x64xf32, #tpu.memory_space<vmem>>, vector<8x1x64xf32>,
    %cst_18 = arith.constant dense<0.000000e+00> : vector<64x64xf32>
    %23 = tpu.matmul %19, %19, %cst_18 {dimension_numbers = #tpu.dot_dimension_numbers<[0], [0], [1], [1], [0, 1, 1, 1], [], []>} : vector<8x64xf32>, vector<8x64xf32>, vector<64x64xf32> -> vector<64x64xf32>
    %24 = arith.addf %12, %23 : vector<64x64xf32>
    %cst_19 = arith.constant 1.250000e-04 : f32
    %25 = vector.broadcast %cst_19 : f32 to vector<64x64xf32>
    %26 = arith.mulf %24, %25 : vector<64x64xf32>
    %c0_20 = arith.constant 0 : index
    %c0_21 = arith.constant 0 : index
    %c0_22 = arith.constant 0 : index
    %27 = vector.load %arg4[%c0_20, %c0_21, %c0_22] : memref<8x64x64xf32, #tpu.memory_space<vmem>>, vector<8x64x64xf32>
    %28 = vector.shape_cast %26 : vector<64x64xf32> to vector<1x64x64xf32>
    %29 = vector.broadcast %28 : vector<1x64x64xf32> to vector<8x64x64xf32>
    %30 = arith.addf %27, %29 : vector<8x64x64xf32>
    %cst_23 = arith.constant -1.000000e+00 : f32
    %cst_24 = arith.constant 1.000000e+00 : f32
    %31 = vector.broadcast %cst_23 : f32 to vector<8x64x64xf32>
    %32 = arith.maximumf %31, %30 : vector<8x64x64xf32>
    %33 = vector.broadcast %cst_24 : f32 to vector<8x64x64xf32>
    %34 = arith.minimumf %33, %32 : vector<8x64x64xf32>
    %c0_25 = arith.constant 0 : index
    %c0_26 = arith.constant 0 : index
    %c0_27 = arith.constant 0 : index
    %35 = vector.load %arg6[%c0_25, %c0_26, %c0_27] : memref<8x64x64xf32, #tpu.memory_space<vmem>>, vector<8x64x64xf32>
    tpu.vector_store %arg6[%c0_25, %c0_26, %c0_27], %34 {strides = array<i32>} : memref<8x64x64xf32, #tpu.memory_space<vmem>>, vector<8x64x64xf32>,
    %c0_28 = arith.constant 0 : index
    %c0_29 = arith.constant 0 : index
    %c0_30 = arith.constant 0 : index
    %36 = vector.load %arg7[%c0_28, %c0_29, %c0_30] : memref<8x2x64xf32, #tpu.memory_space<vmem>>, vector<8x2x64xf32>
    %cst_31 = arith.constant dense<0.000000e+00> : vector<8x2x64xf32>
    %37 = tpu.matmul %36, %34, %cst_31 {dimension_numbers = #tpu.dot_dimension_numbers<[2], [1], [1], [2], [0, 0, 0, 1, 1, 2], [0], [0]>} : vector<8x2x64xf32>, vector<8x64x64xf32>, vector<8x2x64xf32> -> vector<8x2x64xf32>
    %38 = arith.addf %36, %37 : vector<8x2x64xf32>
    %c0_32 = arith.constant 0 : index
    %c0_33 = arith.constant 0 : index
    %c0_34 = arith.constant 0 : index
    %39 = vector.load %arg7[%c0_32, %c0_33, %c0_34] : memref<8x2x64xf32, #tpu.memory_space<vmem>>, vector<8x2x64xf32>
    tpu.vector_store %arg7[%c0_32, %c0_33, %c0_34], %38 {strides = array<i32>} : memref<8x2x64xf32, #tpu.memory_space<vmem>>, vector<8x2x64xf32>,
    %c0_35 = arith.constant 0 : index
    %c0_36 = arith.constant 0 : index
    %c0_37 = arith.constant 0 : index
    %40 = vector.load %arg7[%c0_35, %c0_36, %c0_37] : memref<8x2x64xf32, #tpu.memory_space<vmem>>, vector<8x1x64xf32>
    %41 = vector.shape_cast %40 : vector<8x1x64xf32> to vector<8x64xf32>
    %c0_38 = arith.constant 0 : index
    %c0_39 = arith.constant 0 : index
    %c0_40 = arith.constant 0 : index
    %42 = vector.load %arg5[%c0_38, %c0_39, %c0_40] : memref<2x8x64xf32, #tpu.memory_space<vmem>>, vector<1x8x64xf32>
    %43 = vector.shape_cast %42 : vector<1x8x64xf32> to vector<8x64xf32>
    %44 = vector.shape_cast %41 : vector<8x64xf32> to vector<1x8x64xf32>
    tpu.vector_store %arg5[%c0_38, %c0_39, %c0_40], %44 {strides = array<i32>} : memref<2x8x64xf32, #tpu.memory_space<vmem>>, vector<1x8x64xf32>,
    %c0_41 = arith.constant 0 : index
    %c1_42 = arith.constant 1 : index
    %c0_43 = arith.constant 0 : index
    %45 = vector.load %arg7[%c0_41, %c1_42, %c0_43] : memref<8x2x64xf32, #tpu.memory_space<vmem>>, vector<8x1x64xf32>
    %46 = vector.shape_cast %45 : vector<8x1x64xf32> to vector<8x64xf32>
    %c1_44 = arith.constant 1 : index
    %c0_45 = arith.constant 0 : index
    %c0_46 = arith.constant 0 : index
    %47 = vector.load %arg5[%c1_44, %c0_45, %c0_46] : memref<2x8x64xf32, #tpu.memory_space<vmem>>, vector<1x8x64xf32>
    %48 = vector.shape_cast %47 : vector<1x8x64xf32> to vector<8x64xf32>
    %49 = vector.shape_cast %46 : vector<8x64xf32> to vector<1x8x64xf32>
    tpu.vector_store %arg5[%c1_44, %c0_45, %c0_46], %49 {strides = array<i32>} : memref<2x8x64xf32, #tpu.memory_space<vmem>>, vector<1x8x64xf32>,
    return
  }
  func.func @transform_0(%arg0: i32) -> (i32, i32, i32) {
    %c0_i32 = arith.constant 0 : i32
    %c0_i32_0 = arith.constant 0 : i32
    %c0_i32_1 = arith.constant 0 : i32
    %c0_i32_2 = arith.constant 0 : i32
    return %c0_i32, %c0_i32_0, %c0_i32_1 : i32, i32, i32
  }
  func.func @transform_1(%arg0: i32) -> (i32, i32) {
    %c0_i32 = arith.constant 0 : i32
    %c0_i32_0 = arith.constant 0 : i32
    %c0_i32_1 = arith.constant 0 : i32
    return %c0_i32, %c0_i32_0 : i32, i32
  }
  func.func @transform_2(%arg0: i32) -> (i32, i32) {
    %c0_i32 = arith.constant 0 : i32
    %c0_i32_0 = arith.constant 0 : i32
    %c0_i32_1 = arith.constant 0 : i32
    return %c0_i32, %c0_i32_0 : i32, i32
  }
  func.func @transform_3(%arg0: i32) -> (i32, i32, i32) {
    %c0_i32 = arith.constant 0 : i32
    %c0_i32_0 = arith.constant 0 : i32
    %c0_i32_1 = arith.constant 0 : i32
    %c0_i32_2 = arith.constant 0 : i32
    return %c0_i32, %c0_i32_0, %c0_i32_1 : i32, i32, i32
  }
  func.func @transform_4(%arg0: i32) -> (i32, i32, i32) {
    %c0_i32 = arith.constant 0 : i32
    %c0_i32_0 = arith.constant 0 : i32
    %c0_i32_1 = arith.constant 0 : i32
    %c0_i32_2 = arith.constant 0 : i32
    return %c0_i32, %c0_i32_0, %c0_i32_1 : i32, i32, i32
  }
  func.func @transform_5(%arg0: i32) -> (i32, i32, i32) {
    %c0_i32 = arith.constant 0 : i32
    %c0_i32_0 = arith.constant 0 : i32
    %c0_i32_1 = arith.constant 0 : i32
    %c0_i32_2 = arith.constant 0 : i32
    return %c0_i32, %c0_i32_0, %c0_i32_1 : i32, i32, i32
  }
}

</mosaic_0001>

<llo_original>
// kernel: hebbian_encoder_forward.1
$region0: #{hebbian_encoder_forward.1}
  #allocation0 [shape = 'u32[]', space=smem, size = 0x4, offset = 0x4, fixed_abs, tag = 'smem constant byte address 0x4 - core index']
  #allocation1 [shape = 'u32[144,128]{1,0:T(1,128)}', space=vmem, size = 0x12000, scoped, tag = 'internal scratch']
  #allocation2 [shape = 'f32[8,2,64]{2,1,0:T(2,128)}', space=vmem, size = 0x2000, scoped, tag = 'scratch operand']
  %s0 = inlined_call_operand.vmem [shape: f32[2,36,64], index: 0, kind: input, shape index: {}]
  %s1 = inlined_call_operand.vmem [shape: f32[8,36], index: 1, kind: input, shape index: {}]
  %s2 = inlined_call_operand.vmem [shape: f32[8,1], index: 2, kind: input, shape index: {}]
  %s3 = inlined_call_operand.vmem [shape: f32[8,64,64], index: 3, kind: input, shape index: {}, may-alias: {3,5}]
  %s4 = inlined_call_operand.vmem [shape: f32[2,8,64], index: 4, kind: output, shape index: {0}]
  %s5 = inlined_call_operand.vmem [shape: f32[8,64,64], index: 5, kind: output, shape index: {1}, may-alias: {3,5}]
  %6 = xla_tuple %s4, %s5
  %s7 = sld [smem:[#allocation0]]
  $region34: #{hebbian_encoder_forward.1} parent=0
    _
  %s9 = ssub.s32 1, %s7
  %s10 = scalar_select 0, %s9, %s7
  // Predicated region
  $region2: #{hebbian_encoder_forward.1} parent=0 // pred_check
    _
  $region3: #{hebbian_encoder_forward.1} parent=0 // pred_check_branch
    %12 = sbr.rel (0) target = $region5
  $region4: #{hebbian_encoder_forward.1} parent=0 // pred_region
    _
  $region5: #{hebbian_encoder_forward.1} parent=0 // pred_fallthru
    _
  // Predicated region
  $region6: #{hebbian_encoder_forward.1} parent=0 // pred_check
    _
  $region7: #{hebbian_encoder_forward.1} parent=0 // pred_check_branch
    %14 = sbr.rel (0) target = $region9
  $region8: #{hebbian_encoder_forward.1} parent=0 // pred_region
    _
  $region9: #{hebbian_encoder_forward.1} parent=0 // pred_fallthru
    _
  // Predicated region
  $region10: #{hebbian_encoder_forward.1} parent=0 // pred_check
    _
  $region11: #{hebbian_encoder_forward.1} parent=0 // pred_check_branch
    %16 = sbr.rel (0) target = $region13
  $region12: #{hebbian_encoder_forward.1} parent=0 // pred_region
    _
  $region13: #{hebbian_encoder_forward.1} parent=0 // pred_fallthru
    _
  // Predicated region
  $region14: #{hebbian_encoder_forward.1} parent=0 // pred_check
    _
  $region15: #{hebbian_encoder_forward.1} parent=0 // pred_check_branch
    %18 = sbr.rel (0) target = $region17
  $region16: #{hebbian_encoder_forward.1} parent=0 // pred_region
    _
  $region17: #{hebbian_encoder_forward.1} parent=0 // pred_fallthru
    _
  %v19 = vld [vmem:[%s1] sm:$0xff]
  %v20 = vld [vmem:[%s2] sm:$0xff]
  %v21 = vld [vmem:[%s0] sm:$0xff]
  %v22 = vld [vmem:[%s0 + $0x8] sm:$0xff]
  %v23 = vld [vmem:[%s0 + $0x10] sm:$0xff]
  %v24 = vld [vmem:[%s0 + $0x18] sm:$0xff]
  %v25 = vld [vmem:[%s0 + $0x20] sm:$0xf]
  %27 = vset.pattern.permute.xlu0 0
  %28 = vperm.xlu0 %27, %v20
  %v29 = vpop.permute.xlu0 %28
  %vm31 = vcmask 293888
  %v33 = vsel %vm31, %v19, 0
  %vm35 = vcmask 1043456
  %v37 = vsel %vm35, %v25, 0
  %39 = vmatprep.subr.mxu0 0.0
  %40 = vmatpush1.msra.mxu0 0.0
  %41 = vmatprep.subr.mxu0 0.0
  %42 = vmatpush1.msra.mxu0 0.0
  %43 = vmatprep.subr.mxu0 0.0
  %44 = vmatpush1.msra.mxu0 0.0
  %45 = vmatprep.subr.mxu0 0.0
  %46 = vmatpush1.msra.mxu0 0.0
  %47 = vmatprep.subr.mxu0 0.0
  %48 = vmatpush1.msra.mxu0 0.0
  %49 = vmatprep.subr.mxu0 0.0
  %50 = vmatpush1.msra.mxu0 0.0
  %51 = vmatprep.subr.mxu0 0.0
  %52 = vmatpush1.msra.mxu0 0.0
  %53 = vmatprep.subr.mxu0 0.0
  %54 = vmatpush1.msra.mxu0 0.0
  %55 = vmatprep.subr.mxu0 0.0
  %56 = vmatpush1.msra.mxu0 0.0
  %57 = vmatprep.subr.mxu0 0.0
  %58 = vmatpush1.msra.mxu0 0.0
  %59 = vmatprep.subr.mxu0 0.0
  %60 = vmatpush1.msra.mxu0 0.0
  %61 = vmatprep.subr.mxu0 0.0
  %62 = vmatpush1.msra.mxu0 %v37
  %63 = vmatprep.subr.mxu0 0.0
  %64 = vmatpush1.msra.mxu0 %v24
  %65 = vmatprep.subr.mxu0 0.0
  %66 = vmatpush1.msra.mxu0 %v23
  %67 = vmatprep.subr.mxu0 0.0
  %68 = vmatpush1.msra.mxu0 %v22
  %69 = vmatprep.subr.mxu0 0.0
  %70 = vmatpush1.msra.mxu0 %v21
  %71 = vmatprep.subr.mxu0 0.0
  %72 = vmatpush2.msra.mxu0 0.0
  %73 = vmatprep.subr.mxu0 0.0
  %74 = vmatpush2.msra.mxu0 0.0
  %75 = vmatprep.subr.mxu0 0.0
  %76 = vmatpush2.msra.mxu0 0.0
  %77 = vmatprep.subr.mxu0 0.0
  %78 = vmatpush2.msra.mxu0 0.0
  %79 = vmatprep.subr.mxu0 0.0
  %80 = vmatpush2.msra.mxu0 0.0
  %81 = vmatprep.subr.mxu0 0.0
  %82 = vmatpush2.msra.mxu0 0.0
  %83 = vmatprep.subr.mxu0 0.0
  %84 = vmatpush2.msra.mxu0 0.0
  %85 = vmatprep.subr.mxu0 0.0
  %86 = vmatpush2.msra.mxu0 0.0
  %87 = vmatprep.subr.mxu0 0.0
  %88 = vmatpush2.msra.mxu0 0.0
  %89 = vmatprep.subr.mxu0 0.0
  %90 = vmatpush2.msra.mxu0 0.0
  %91 = vmatprep.subr.mxu0 0.0
  %92 = vmatpush2.msra.mxu0 0.0
  %93 = vmatprep.subr.mxu0 0.0
  %94 = vmatpush2.msra.mxu0 0.0
  %95 = vmatprep.subr.mxu0 0.0
  %96 = vmatpush2.msra.mxu0 0.0
  %97 = vmatprep.subr.mxu0 0.0
  %98 = vmatpush2.msra.mxu0 0.0
  %99 = vmatprep.subr.mxu0 0.0
  %100 = vmatpush2.msra.mxu0 0.0
  %101 = vmatprep.subr.mxu0 0.0
  %102 = vmatpush2.msra.mxu0 0.0
  %103 = vmatprep.mubr.f32.mxu0 0.0
  %104 = vmatmul.mubr.f32.gmra.mxu0 %v33
  %v105 = vpop.f32.mrf.mxu0
  %v106 = vadd.f32 %v29, %v105
  %v107 = vpop.f32.mrf.mxu0
  %108 = vdwg.mxu0
  %v109 = vmax.f32 %v106, 0.0
  %v111 = vcombine.high %v109, %v109
  %v113 = vunpack.c.l.s4 1966171168
  %v114 = vunpack.c.0.s8 %v113
  %v115 = vlaneseq
  %v116 = vshrl.u32 %v115, 7
  %v117 = vsub.s32 %v114, %v116
  %v118 = vrot.slane %v109, %v117
  %v120 = vunpack.c.l.s4 1966171168
  %v121 = vunpack.c.0.s8 %v120
  %v122 = vlaneseq
  %v123 = vshrl.u32 %v122, 7
  %v124 = vsub.s32 %v121, %v123
  %v125 = vrot.slane %v111, %v124
  %v126 = vcombine.high %v118, %v118
  %v127 = vcombine.high %v125, %v125
  %v129 = vunpack.c.l.s4 1966171168
  %v130 = vunpack.c.0.s8 %v129
  %v131 = vlaneseq
  %v132 = vshrl.u32 %v131, 7
  %v133 = vsub.s32 %v130, %v132
  %v134 = vrot.slane %v118, %v133
  %v136 = vunpack.c.l.s4 1966171168
  %v137 = vunpack.c.0.s8 %v136
  %v138 = vlaneseq
  %v139 = vshrl.u32 %v138, 7
  %v140 = vsub.s32 %v137, %v139
  %v141 = vrot.slane %v125, %v140
  %v143 = vunpack.c.l.s4 1966171168
  %v144 = vunpack.c.0.s8 %v143
  %v145 = vlaneseq
  %v146 = vshrl.u32 %v145, 7
  %v147 = vsub.s32 %v144, %v146
  %v148 = vrot.slane %v126, %v147
  %v150 = vunpack.c.l.s4 1966171168
  %v151 = vunpack.c.0.s8 %v150
  %v152 = vlaneseq
  %v153 = vshrl.u32 %v152, 7
  %v154 = vsub.s32 %v151, %v153
  %v155 = vrot.slane %v127, %v154
  %v156 = vcombine.high %v134, %v134
  %v157 = vcombine.high %v141, %v141
  %v158 = vcombine.high %v148, %v148
  %v159 = vcombine.high %v155, %v155
  %vm168 = vcmask 516096
  %169 = vst.msk [vmem:[#allocation2] sm:$0x1] %vm168, %v134
  %170 = vst.msk [vmem:[#allocation2 + $0x2] sm:$0x1] %vm168, %v148
  %171 = vst.msk [vmem:[#allocation2 + $0x4] sm:$0x1] %vm168, %v156
  %172 = vst.msk [vmem:[#allocation2 + $0x6] sm:$0x1] %vm168, %v158
  %173 = vst.msk [vmem:[#allocation2 + $0x8] sm:$0x1] %vm168, %v141
  %174 = vst.msk [vmem:[#allocation2 + $0xa] sm:$0x1] %vm168, %v155
  %175 = vst.msk [vmem:[#allocation2 + $0xc] sm:$0x1] %vm168, %v157
  %176 = vst.msk [vmem:[#allocation2 + $0xe] sm:$0x1] %vm168, %v159
  %s177 = scalar_lea.vmem %s0, 40
  %v178 = vld [vmem:[%s177] sm:$0xff]
  %v179 = vld [vmem:[%s177 + $0x8] sm:$0xff]
  %v180 = vld [vmem:[%s177 + $0x10] sm:$0xff]
  %v181 = vld [vmem:[%s177 + $0x18] sm:$0xff]
  %v182 = vld [vmem:[%s177 + $0x20] sm:$0xf]
  %v184 = vsel %vm35, %v182, 0
  %186 = vmatprep.subr.mxu0 0.0
  %187 = vmatpush1.msra.mxu0 0.0
  %188 = vmatprep.subr.mxu0 0.0
  %189 = vmatpush1.msra.mxu0 0.0
  %190 = vmatprep.subr.mxu0 0.0
  %191 = vmatpush1.msra.mxu0 0.0
  %192 = vmatprep.subr.mxu0 0.0
  %193 = vmatpush1.msra.mxu0 0.0
  %194 = vmatprep.subr.mxu0 0.0
  %195 = vmatpush1.msra.mxu0 0.0
  %196 = vmatprep.subr.mxu0 0.0
  %197 = vmatpush1.msra.mxu0 0.0
  %198 = vmatprep.subr.mxu0 0.0
  %199 = vmatpush1.msra.mxu0 0.0
  %200 = vmatprep.subr.mxu0 0.0
  %201 = vmatpush1.msra.mxu0 0.0
  %202 = vmatprep.subr.mxu0 0.0
  %203 = vmatpush1.msra.mxu0 0.0
  %204 = vmatprep.subr.mxu0 0.0
  %205 = vmatpush1.msra.mxu0 0.0
  %206 = vmatprep.subr.mxu0 0.0
  %207 = vmatpush1.msra.mxu0 0.0
  %208 = vmatprep.subr.mxu0 0.0
  %209 = vmatpush1.msra.mxu0 %v184
  %210 = vmatprep.subr.mxu0 0.0
  %211 = vmatpush1.msra.mxu0 %v181
  %212 = vmatprep.subr.mxu0 0.0
  %213 = vmatpush1.msra.mxu0 %v180
  %214 = vmatprep.subr.mxu0 0.0
  %215 = vmatpush1.msra.mxu0 %v179
  %216 = vmatprep.subr.mxu0 0.0
  %217 = vmatpush1.msra.mxu0 %v178
  %218 = vmatprep.subr.mxu0 0.0
  %219 = vmatpush2.msra.mxu0 0.0
  %220 = vmatprep.subr.mxu0 0.0
  %221 = vmatpush2.msra.mxu0 0.0
  %222 = vmatprep.subr.mxu0 0.0
  %223 = vmatpush2.msra.mxu0 0.0
  %224 = vmatprep.subr.mxu0 0.0
  %225 = vmatpush2.msra.mxu0 0.0
  %226 = vmatprep.subr.mxu0 0.0
  %227 = vmatpush2.msra.mxu0 0.0
  %228 = vmatprep.subr.mxu0 0.0
  %229 = vmatpush2.msra.mxu0 0.0
  %230 = vmatprep.subr.mxu0 0.0
  %231 = vmatpush2.msra.mxu0 0.0
  %232 = vmatprep.subr.mxu0 0.0
  %233 = vmatpush2.msra.mxu0 0.0
  %234 = vmatprep.subr.mxu0 0.0
  %235 = vmatpush2.msra.mxu0 0.0
  %236 = vmatprep.subr.mxu0 0.0
  %237 = vmatpush2.msra.mxu0 0.0
  %238 = vmatprep.subr.mxu0 0.0
  %239 = vmatpush2.msra.mxu0 0.0
  %240 = vmatprep.subr.mxu0 0.0
  %241 = vmatpush2.msra.mxu0 0.0
  %242 = vmatprep.subr.mxu0 0.0
  %243 = vmatpush2.msra.mxu0 0.0
  %244 = vmatprep.subr.mxu0 0.0
  %245 = vmatpush2.msra.mxu0 0.0
  %246 = vmatprep.subr.mxu0 0.0
  %247 = vmatpush2.msra.mxu0 0.0
  %248 = vmatprep.subr.mxu0 0.0
  %249 = vmatpush2.msra.mxu0 0.0
  %250 = vmatprep.mubr.f32.mxu0 0.0
  %251 = vmatmul.mubr.f32.gmra.mxu0 %v33
  %v252 = vpop.f32.mrf.mxu0
  %v253 = vadd.f32 %v29, %v252
  %v254 = vpop.f32.mrf.mxu0
  %255 = vdwg.mxu0
  %v256 = vmax.f32 %v253, 0.0
  %v258 = vcombine.high %v256, %v256
  %v260 = vunpack.c.l.s4 1966171168
  %v261 = vunpack.c.0.s8 %v260
  %v262 = vlaneseq
  %v263 = vshrl.u32 %v262, 7
  %v264 = vsub.s32 %v261, %v263
  %v265 = vrot.slane %v256, %v264
  %v267 = vunpack.c.l.s4 1966171168
  %v268 = vunpack.c.0.s8 %v267
  %v269 = vlaneseq
  %v270 = vshrl.u32 %v269, 7
  %v271 = vsub.s32 %v268, %v270
  %v272 = vrot.slane %v258, %v271
  %v273 = vcombine.high %v265, %v265
  %v274 = vcombine.high %v272, %v272
  %v276 = vunpack.c.l.s4 1966171168
  %v277 = vunpack.c.0.s8 %v276
  %v278 = vlaneseq
  %v279 = vshrl.u32 %v278, 7
  %v280 = vsub.s32 %v277, %v279
  %v281 = vrot.slane %v265, %v280
  %v283 = vunpack.c.l.s4 1966171168
  %v284 = vunpack.c.0.s8 %v283
  %v285 = vlaneseq
  %v286 = vshrl.u32 %v285, 7
  %v287 = vsub.s32 %v284, %v286
  %v288 = vrot.slane %v272, %v287
  %v290 = vunpack.c.l.s4 1966171168
  %v291 = vunpack.c.0.s8 %v290
  %v292 = vlaneseq
  %v293 = vshrl.u32 %v292, 7
  %v294 = vsub.s32 %v291, %v293
  %v295 = vrot.slane %v273, %v294
  %v297 = vunpack.c.l.s4 1966171168
  %v298 = vunpack.c.0.s8 %v297
  %v299 = vlaneseq
  %v300 = vshrl.u32 %v299, 7
  %v301 = vsub.s32 %v298, %v300
  %v302 = vrot.slane %v274, %v301
  %v303 = vcombine.high %v281, %v281
  %v304 = vcombine.high %v288, %v288
  %v305 = vcombine.high %v295, %v295
  %v306 = vcombine.high %v302, %v302
  %315 = vst.msk [vmem:[#allocation2 + $0x1] sm:$0x1] %vm168, %v281
  %316 = vst.msk [vmem:[#allocation2 + $0x3] sm:$0x1] %vm168, %v295
  %317 = vst.msk [vmem:[#allocation2 + $0x5] sm:$0x1] %vm168, %v303
  %318 = vst.msk [vmem:[#allocation2 + $0x7] sm:$0x1] %vm168, %v305
  %319 = vst.msk [vmem:[#allocation2 + $0x9] sm:$0x1] %vm168, %v288
  %320 = vst.msk [vmem:[#allocation2 + $0xb] sm:$0x1] %vm168, %v302
  %321 = vst.msk [vmem:[#allocation2 + $0xd] sm:$0x1] %vm168, %v304
  %322 = vst.msk [vmem:[#allocation2 + $0xf] sm:$0x1] %vm168, %v306
  %323 = vxpose.xlu0.b32.start [1/16] %v256, 128
  %324 = vxpose.xlu0.b32.cont [2/16] 0.0, 128
  %325 = vxpose.xlu0.b32.cont [3/16] 0.0, 128
  %326 = vxpose.xlu0.b32.cont [4/16] 0.0, 128
  %327 = vxpose.xlu0.b32.cont [5/16] 0.0, 128
  %328 = vxpose.xlu0.b32.cont [6/16] 0.0, 128
  %329 = vxpose.xlu0.b32.cont [7/16] 0.0, 128
  %330 = vxpose.xlu0.b32.cont [8/16] 0.0, 128
  %331 = vxpose.xlu0.b32.cont [9/16] 0.0, 128
  %332 = vxpose.xlu0.b32.cont [10/16] 0.0, 128
  %333 = vxpose.xlu0.b32.cont [11/16] 0.0, 128
  %334 = vxpose.xlu0.b32.cont [12/16] 0.0, 128
  %335 = vxpose.xlu0.b32.cont [13/16] 0.0, 128
  %336 = vxpose.xlu0.b32.cont [14/16] 0.0, 128
  %337 = vxpose.xlu0.b32.cont [15/16] 0.0, 128
  %338 = vxpose.xlu0.b32.end [16/16] 0.0, 128
  %v339 = vpop.trf.xlu0
  %v340 = vpop.trf.xlu0
  %v341 = vpop.trf.xlu0
  %v342 = vpop.trf.xlu0
  %v343 = vpop.trf.xlu0
  %v344 = vpop.trf.xlu0
  %v345 = vpop.trf.xlu0
  %v346 = vpop.trf.xlu0
  %v347 = vpop.trf.xlu0
  %v348 = vpop.trf.xlu0
  %v349 = vpop.trf.xlu0
  %v350 = vpop.trf.xlu0
  %v351 = vpop.trf.xlu0
  %v352 = vpop.trf.xlu0
  %v353 = vpop.trf.xlu0
  %v354 = vpop.trf.xlu0
  %vm355 = vcmask 64512
  %v357 = vsel %vm355, %v339, 0
  %v360 = vsel %vm355, %v340, 0
  %v363 = vsel %vm355, %v341, 0
  %v366 = vsel %vm355, %v342, 0
  %v369 = vsel %vm355, %v343, 0
  %v372 = vsel %vm355, %v344, 0
  %v375 = vsel %vm355, %v345, 0
  %v378 = vsel %vm355, %v346, 0
  %380 = vmatprep.subr.mxu0 0.0
  %381 = vmatpush1.msra.mxu0 0.0
  %382 = vmatprep.subr.mxu0 0.0
  %383 = vmatpush1.msra.mxu0 0.0
  %384 = vmatprep.subr.mxu0 0.0
  %385 = vmatpush1.msra.mxu0 0.0
  %386 = vmatprep.subr.mxu0 0.0
  %387 = vmatpush1.msra.mxu0 0.0
  %388 = vmatprep.subr.mxu0 0.0
  %389 = vmatpush1.msra.mxu0 0.0
  %390 = vmatprep.subr.mxu0 0.0
  %391 = vmatpush1.msra.mxu0 0.0
  %392 = vmatprep.subr.mxu0 0.0
  %393 = vmatpush1.msra.mxu0 0.0
  %394 = vmatprep.subr.mxu0 0.0
  %395 = vmatpush1.msra.mxu0 0.0
  %396 = vmatprep.subr.mxu0 0.0
  %397 = vmatpush1.msra.mxu0 0.0
  %398 = vmatprep.subr.mxu0 0.0
  %399 = vmatpush1.msra.mxu0 0.0
  %400 = vmatprep.subr.mxu0 0.0
  %401 = vmatpush1.msra.mxu0 0.0
  %402 = vmatprep.subr.mxu0 0.0
  %403 = vmatpush1.msra.mxu0 0.0
  %404 = vmatprep.subr.mxu0 0.0
  %405 = vmatpush1.msra.mxu0 0.0
  %406 = vmatprep.subr.mxu0 0.0
  %407 = vmatpush1.msra.mxu0 0.0
  %408 = vmatprep.subr.mxu0 0.0
  %409 = vmatpush1.msra.mxu0 0.0
  %410 = vmatprep.subr.mxu0 0.0
  %411 = vmatpush1.msra.mxu0 %v256
  %412 = vmatprep.subr.mxu0 0.0
  %413 = vmatpush2.msra.mxu0 0.0
  %414 = vmatprep.subr.mxu0 0.0
  %415 = vmatpush2.msra.mxu0 0.0
  %416 = vmatprep.subr.mxu0 0.0
  %417 = vmatpush2.msra.mxu0 0.0
  %418 = vmatprep.subr.mxu0 0.0
  %419 = vmatpush2.msra.mxu0 0.0
  %420 = vmatprep.subr.mxu0 0.0
  %421 = vmatpush2.msra.mxu0 0.0
  %422 = vmatprep.subr.mxu0 0.0
  %423 = vmatpush2.msra.mxu0 0.0
  %424 = vmatprep.subr.mxu0 0.0
  %425 = vmatpush2.msra.mxu0 0.0
  %426 = vmatprep.subr.mxu0 0.0
  %427 = vmatpush2.msra.mxu0 0.0
  %428 = vmatprep.subr.mxu0 0.0
  %429 = vmatpush2.msra.mxu0 0.0
  %430 = vmatprep.subr.mxu0 0.0
  %431 = vmatpush2.msra.mxu0 0.0
  %432 = vmatprep.subr.mxu0 0.0
  %433 = vmatpush2.msra.mxu0 0.0
  %434 = vmatprep.subr.mxu0 0.0
  %435 = vmatpush2.msra.mxu0 0.0
  %436 = vmatprep.subr.mxu0 0.0
  %437 = vmatpush2.msra.mxu0 0.0
  %438 = vmatprep.subr.mxu0 0.0
  %439 = vmatpush2.msra.mxu0 0.0
  %440 = vmatprep.subr.mxu0 0.0
  %441 = vmatpush2.msra.mxu0 0.0
  %442 = vmatprep.subr.mxu0 0.0
  %443 = vmatpush2.msra.mxu0 0.0
  %444 = vmatprep.mubr.f32.mxu0 0.0
  %445 = vmatmul.mubr.f32.gmra.mxu0 %v357
  %v446 = vpop.f32.mrf.mxu0
  %v447 = vadd.f32 0.0, %v446
  %v448 = vpop.f32.mrf.mxu0
  %449 = vmatprep.mubr.f32.mxu0 0.0
  %450 = vmatmul.mubr.f32.gmra.mxu0 %v360
  %v451 = vpop.f32.mrf.mxu0
  %v452 = vadd.f32 0.0, %v451
  %v453 = vpop.f32.mrf.mxu0
  %454 = vmatprep.mubr.f32.mxu0 0.0
  %455 = vmatmul.mubr.f32.gmra.mxu0 %v363
  %v456 = vpop.f32.mrf.mxu0
  %v457 = vadd.f32 0.0, %v456
  %v458 = vpop.f32.mrf.mxu0
  %459 = vmatprep.mubr.f32.mxu0 0.0
  %460 = vmatmul.mubr.f32.gmra.mxu0 %v366
  %v461 = vpop.f32.mrf.mxu0
  %v462 = vadd.f32 0.0, %v461
  %v463 = vpop.f32.mrf.mxu0
  %464 = vmatprep.mubr.f32.mxu0 0.0
  %465 = vmatmul.mubr.f32.gmra.mxu0 %v369
  %v466 = vpop.f32.mrf.mxu0
  %v467 = vadd.f32 0.0, %v466
  %v468 = vpop.f32.mrf.mxu0
  %469 = vmatprep.mubr.f32.mxu0 0.0
  %470 = vmatmul.mubr.f32.gmra.mxu0 %v372
  %v471 = vpop.f32.mrf.mxu0
  %v472 = vadd.f32 0.0, %v471
  %v473 = vpop.f32.mrf.mxu0
  %474 = vmatprep.mubr.f32.mxu0 0.0
  %475 = vmatmul.mubr.f32.gmra.mxu0 %v375
  %v476 = vpop.f32.mrf.mxu0
  %v477 = vadd.f32 0.0, %v476
  %v478 = vpop.f32.mrf.mxu0
  %479 = vmatprep.mubr.f32.mxu0 0.0
  %480 = vmatmul.mubr.f32.gmra.mxu0 %v378
  %v481 = vpop.f32.mrf.mxu0
  %v482 = vadd.f32 0.0, %v481
  %v483 = vpop.f32.mrf.mxu0
  %484 = vdwg.mxu0
  %485 = vxpose.xlu0.b32.start [1/16] %v109, 128
  %486 = vxpose.xlu0.b32.cont [2/16] 0.0, 128
  %487 = vxpose.xlu0.b32.cont [3/16] 0.0, 128
  %488 = vxpose.xlu0.b32.cont [4/16] 0.0, 128
  %489 = vxpose.xlu0.b32.cont [5/16] 0.0, 128
  %490 = vxpose.xlu0.b32.cont [6/16] 0.0, 128
  %491 = vxpose.xlu0.b32.cont [7/16] 0.0, 128
  %492 = vxpose.xlu0.b32.cont [8/16] 0.0, 128
  %493 = vxpose.xlu0.b32.cont [9/16] 0.0, 128
  %494 = vxpose.xlu0.b32.cont [10/16] 0.0, 128
  %495 = vxpose.xlu0.b32.cont [11/16] 0.0, 128
  %496 = vxpose.xlu0.b32.cont [12/16] 0.0, 128
  %497 = vxpose.xlu0.b32.cont [13/16] 0.0, 128
  %498 = vxpose.xlu0.b32.cont [14/16] 0.0, 128
  %499 = vxpose.xlu0.b32.cont [15/16] 0.0, 128
  %500 = vxpose.xlu0.b32.end [16/16] 0.0, 128
  %v501 = vpop.trf.xlu0
  %v502 = vpop.trf.xlu0
  %v503 = vpop.trf.xlu0
  %v504 = vpop.trf.xlu0
  %v505 = vpop.trf.xlu0
  %v506 = vpop.trf.xlu0
  %v507 = vpop.trf.xlu0
  %v508 = vpop.trf.xlu0
  %v509 = vpop.trf.xlu0
  %v510 = vpop.trf.xlu0
  %v511 = vpop.trf.xlu0
  %v512 = vpop.trf.xlu0
  %v513 = vpop.trf.xlu0
  %v514 = vpop.trf.xlu0
  %v515 = vpop.trf.xlu0
  %v516 = vpop.trf.xlu0
  %v518 = vsel %vm355, %v501, 0
  %v521 = vsel %vm355, %v502, 0
  %v524 = vsel %vm355, %v503, 0
  %v527 = vsel %vm355, %v504, 0
  %v530 = vsel %vm355, %v505, 0
  %v533 = vsel %vm355, %v506, 0
  %v536 = vsel %vm355, %v507, 0
  %v539 = vsel %vm355, %v508, 0
  %541 = vmatprep.subr.mxu0 0.0
  %542 = vmatpush1.msra.mxu0 0.0
  %543 = vmatprep.subr.mxu0 0.0
  %544 = vmatpush1.msra.mxu0 0.0
  %545 = vmatprep.subr.mxu0 0.0
  %546 = vmatpush1.msra.mxu0 0.0
  %547 = vmatprep.subr.mxu0 0.0
  %548 = vmatpush1.msra.mxu0 0.0
  %549 = vmatprep.subr.mxu0 0.0
  %550 = vmatpush1.msra.mxu0 0.0
  %551 = vmatprep.subr.mxu0 0.0
  %552 = vmatpush1.msra.mxu0 0.0
  %553 = vmatprep.subr.mxu0 0.0
  %554 = vmatpush1.msra.mxu0 0.0
  %555 = vmatprep.subr.mxu0 0.0
  %556 = vmatpush1.msra.mxu0 0.0
  %557 = vmatprep.subr.mxu0 0.0
  %558 = vmatpush1.msra.mxu0 0.0
  %559 = vmatprep.subr.mxu0 0.0
  %560 = vmatpush1.msra.mxu0 0.0
  %561 = vmatprep.subr.mxu0 0.0
  %562 = vmatpush1.msra.mxu0 0.0
  %563 = vmatprep.subr.mxu0 0.0
  %564 = vmatpush1.msra.mxu0 0.0
  %565 = vmatprep.subr.mxu0 0.0
  %566 = vmatpush1.msra.mxu0 0.0
  %567 = vmatprep.subr.mxu0 0.0
  %568 = vmatpush1.msra.mxu0 0.0
  %569 = vmatprep.subr.mxu0 0.0
  %570 = vmatpush1.msra.mxu0 0.0
  %571 = vmatprep.subr.mxu0 0.0
  %572 = vmatpush1.msra.mxu0 %v109
  %573 = vmatprep.subr.mxu0 0.0
  %574 = vmatpush2.msra.mxu0 0.0
  %575 = vmatprep.subr.mxu0 0.0
  %576 = vmatpush2.msra.mxu0 0.0
  %577 = vmatprep.subr.mxu0 0.0
  %578 = vmatpush2.msra.mxu0 0.0
  %579 = vmatprep.subr.mxu0 0.0
  %580 = vmatpush2.msra.mxu0 0.0
  %581 = vmatprep.subr.mxu0 0.0
  %582 = vmatpush2.msra.mxu0 0.0
  %583 = vmatprep.subr.mxu0 0.0
  %584 = vmatpush2.msra.mxu0 0.0
  %585 = vmatprep.subr.mxu0 0.0
  %586 = vmatpush2.msra.mxu0 0.0
  %587 = vmatprep.subr.mxu0 0.0
  %588 = vmatpush2.msra.mxu0 0.0
  %589 = vmatprep.subr.mxu0 0.0
  %590 = vmatpush2.msra.mxu0 0.0
  %591 = vmatprep.subr.mxu0 0.0
  %592 = vmatpush2.msra.mxu0 0.0
  %593 = vmatprep.subr.mxu0 0.0
  %594 = vmatpush2.msra.mxu0 0.0
  %595 = vmatprep.subr.mxu0 0.0
  %596 = vmatpush2.msra.mxu0 0.0
  %597 = vmatprep.subr.mxu0 0.0
  %598 = vmatpush2.msra.mxu0 0.0
  %599 = vmatprep.subr.mxu0 0.0
  %600 = vmatpush2.msra.mxu0 0.0
  %601 = vmatprep.subr.mxu0 0.0
  %602 = vmatpush2.msra.mxu0 0.0
  %603 = vmatprep.subr.mxu0 0.0
  %604 = vmatpush2.msra.mxu0 0.0
  %605 = vmatprep.mubr.f32.mxu0 0.0
  %606 = vmatmul.mubr.f32.gmra.mxu0 %v518
  %v607 = vpop.f32.mrf.mxu0
  %v608 = vadd.f32 %v447, %v607
  %v609 = vpop.f32.mrf.mxu0
  %610 = vmatprep.mubr.f32.mxu0 0.0
  %611 = vmatmul.mubr.f32.gmra.mxu0 %v521
  %v612 = vpop.f32.mrf.mxu0
  %v613 = vadd.f32 %v452, %v612
  %v614 = vpop.f32.mrf.mxu0
  %615 = vmatprep.mubr.f32.mxu0 0.0
  %616 = vmatmul.mubr.f32.gmra.mxu0 %v524
  %v617 = vpop.f32.mrf.mxu0
  %v618 = vadd.f32 %v457, %v617
  %v619 = vpop.f32.mrf.mxu0
  %620 = vmatprep.mubr.f32.mxu0 0.0
  %621 = vmatmul.mubr.f32.gmra.mxu0 %v527
  %v622 = vpop.f32.mrf.mxu0
  %v623 = vadd.f32 %v462, %v622
  %v624 = vpop.f32.mrf.mxu0
  %625 = vmatprep.mubr.f32.mxu0 0.0
  %626 = vmatmul.mubr.f32.gmra.mxu0 %v530
  %v627 = vpop.f32.mrf.mxu0
  %v628 = vadd.f32 %v467, %v627
  %v629 = vpop.f32.mrf.mxu0
  %630 = vmatprep.mubr.f32.mxu0 0.0
  %631 = vmatmul.mubr.f32.gmra.mxu0 %v533
  %v632 = vpop.f32.mrf.mxu0
  %v633 = vadd.f32 %v472, %v632
  %v634 = vpop.f32.mrf.mxu0
  %635 = vmatprep.mubr.f32.mxu0 0.0
  %636 = vmatmul.mubr.f32.gmra.mxu0 %v536
  %v637 = vpop.f32.mrf.mxu0
  %v638 = vadd.f32 %v477, %v637
  %v639 = vpop.f32.mrf.mxu0
  %640 = vmatprep.mubr.f32.mxu0 0.0
  %641 = vmatmul.mubr.f32.gmra.mxu0 %v539
  %v642 = vpop.f32.mrf.mxu0
  %v643 = vadd.f32 %v482, %v642
  %v644 = vpop.f32.mrf.mxu0
  %645 = vdwg.mxu0
  %v646 = vmul.f32 %v608, 0.000125
  %v647 = vmul.f32 %v613, 0.000125
  %v648 = vmul.f32 %v618, 0.000125
  %v649 = vmul.f32 %v623, 0.000125
  %v650 = vmul.f32 %v628, 0.000125
  %v651 = vmul.f32 %v633, 0.000125
  %v652 = vmul.f32 %v638, 0.000125
  %v653 = vmul.f32 %v643, 0.000125
  %v654 = vld [vmem:[%s3] sm:$0xff]
  %v655 = vld [vmem:[%s3 + $0x8] sm:$0xff]
  %v656 = vld [vmem:[%s3 + $0x10] sm:$0xff]
  %v657 = vld [vmem:[%s3 + $0x18] sm:$0xff]
  %v658 = vld [vmem:[%s3 + $0x20] sm:$0xff]
  %v659 = vld [vmem:[%s3 + $0x28] sm:$0xff]
  %v660 = vld [vmem:[%s3 + $0x30] sm:$0xff]
  %v661 = vld [vmem:[%s3 + $0x38] sm:$0xff]
  %v662 = vld [vmem:[%s3 + $0x40] sm:$0xff]
  %v663 = vld [vmem:[%s3 + $0x48] sm:$0xff]
  %v664 = vld [vmem:[%s3 + $0x50] sm:$0xff]
  %v665 = vld [vmem:[%s3 + $0x58] sm:$0xff]
  %v666 = vld [vmem:[%s3 + $0x60] sm:$0xff]
  %v667 = vld [vmem:[%s3 + $0x68] sm:$0xff]
  %v668 = vld [vmem:[%s3 + $0x70] sm:$0xff]
  %v669 = vld [vmem:[%s3 + $0x78] sm:$0xff]
  %v670 = vld [vmem:[%s3 + $0x80] sm:$0xff]
  %v671 = vld [vmem:[%s3 + $0x88] sm:$0xff]
  %v672 = vld [vmem:[%s3 + $0x90] sm:$0xff]
  %v673 = vld [vmem:[%s3 + $0x98] sm:$0xff]
  %v674 = vld [vmem:[%s3 + $0xa0] sm:$0xff]
  %v675 = vld [vmem:[%s3 + $0xa8] sm:$0xff]
  %v676 = vld [vmem:[%s3 + $0xb0] sm:$0xff]
  %v677 = vld [vmem:[%s3 + $0xb8] sm:$0xff]
  %v678 = vld [vmem:[%s3 + $0xc0] sm:$0xff]
  %v679 = vld [vmem:[%s3 + $0xc8] sm:$0xff]
  %v680 = vld [vmem:[%s3 + $0xd0] sm:$0xff]
  %v681 = vld [vmem:[%s3 + $0xd8] sm:$0xff]
  %v682 = vld [vmem:[%s3 + $0xe0] sm:$0xff]
  %v683 = vld [vmem:[%s3 + $0xe8] sm:$0xff]
  %v684 = vld [vmem:[%s3 + $0xf0] sm:$0xff]
  %v685 = vld [vmem:[%s3 + $0xf8] sm:$0xff]
  %v686 = vld [vmem:[%s3 + $0x100] sm:$0xff]
  %v687 = vld [vmem:[%s3 + $0x108] sm:$0xff]
  %v688 = vld [vmem:[%s3 + $0x110] sm:$0xff]
  %v689 = vld [vmem:[%s3 + $0x118] sm:$0xff]
  %v690 = vld [vmem:[%s3 + $0x120] sm:$0xff]
  %v691 = vld [vmem:[%s3 + $0x128] sm:$0xff]
  %v692 = vld [vmem:[%s3 + $0x130] sm:$0xff]
  %v693 = vld [vmem:[%s3 + $0x138] sm:$0xff]
  %v694 = vld [vmem:[%s3 + $0x140] sm:$0xff]
  %v695 = vld [vmem:[%s3 + $0x148] sm:$0xff]
  %v696 = vld [vmem:[%s3 + $0x150] sm:$0xff]
  %v697 = vld [vmem:[%s3 + $0x158] sm:$0xff]
  %v698 = vld [vmem:[%s3 + $0x160] sm:$0xff]
  %v699 = vld [vmem:[%s3 + $0x168] sm:$0xff]
  %v700 = vld [vmem:[%s3 + $0x170] sm:$0xff]
  %v701 = vld [vmem:[%s3 + $0x178] sm:$0xff]
  %v702 = vld [vmem:[%s3 + $0x180] sm:$0xff]
  %v703 = vld [vmem:[%s3 + $0x188] sm:$0xff]
  %v704 = vld [vmem:[%s3 + $0x190] sm:$0xff]
  %v705 = vld [vmem:[%s3 + $0x198] sm:$0xff]
  %v706 = vld [vmem:[%s3 + $0x1a0] sm:$0xff]
  %v707 = vld [vmem:[%s3 + $0x1a8] sm:$0xff]
  %v708 = vld [vmem:[%s3 + $0x1b0] sm:$0xff]
  %v709 = vld [vmem:[%s3 + $0x1b8] sm:$0xff]
  %v710 = vld [vmem:[%s3 + $0x1c0] sm:$0xff]
  %v711 = vld [vmem:[%s3 + $0x1c8] sm:$0xff]
  %v712 = vld [vmem:[%s3 + $0x1d0] sm:$0xff]
  %v713 = vld [vmem:[%s3 + $0x1d8] sm:$0xff]
  %v714 = vld [vmem:[%s3 + $0x1e0] sm:$0xff]
  %v715 = vld [vmem:[%s3 + $0x1e8] sm:$0xff]
  %v716 = vld [vmem:[%s3 + $0x1f0] sm:$0xff]
  %v717 = vld [vmem:[%s3 + $0x1f8] sm:$0xff]
  %v718 = vadd.f32 %v654, %v646
  %v719 = vadd.f32 %v655, %v647
  %v720 = vadd.f32 %v656, %v648
  %v721 = vadd.f32 %v657, %v649
  %v722 = vadd.f32 %v658, %v650
  %v723 = vadd.f32 %v659, %v651
  %v724 = vadd.f32 %v660, %v652
  %v725 = vadd.f32 %v661, %v653
  %v726 = vadd.f32 %v662, %v646
  %v727 = vadd.f32 %v663, %v647
  %v728 = vadd.f32 %v664, %v648
  %v729 = vadd.f32 %v665, %v649
  %v730 = vadd.f32 %v666, %v650
  %v731 = vadd.f32 %v667, %v651
  %v732 = vadd.f32 %v668, %v652
  %v733 = vadd.f32 %v669, %v653
  %v734 = vadd.f32 %v670, %v646
  %v735 = vadd.f32 %v671, %v647
  %v736 = vadd.f32 %v672, %v648
  %v737 = vadd.f32 %v673, %v649
  %v738 = vadd.f32 %v674, %v650
  %v739 = vadd.f32 %v675, %v651
  %v740 = vadd.f32 %v676, %v652
  %v741 = vadd.f32 %v677, %v653
  %v742 = vadd.f32 %v678, %v646
  %v743 = vadd.f32 %v679, %v647
  %v744 = vadd.f32 %v680, %v648
  %v745 = vadd.f32 %v681, %v649
  %v746 = vadd.f32 %v682, %v650
  %v747 = vadd.f32 %v683, %v651
  %v748 = vadd.f32 %v684, %v652
  %v749 = vadd.f32 %v685, %v653
  %v750 = vadd.f32 %v686, %v646
  %v751 = vadd.f32 %v687, %v647
  %v752 = vadd.f32 %v688, %v648
  %v753 = vadd.f32 %v689, %v649
  %v754 = vadd.f32 %v690, %v650
  %v755 = vadd.f32 %v691, %v651
  %v756 = vadd.f32 %v692, %v652
  %v757 = vadd.f32 %v693, %v653
  %v758 = vadd.f32 %v694, %v646
  %v759 = vadd.f32 %v695, %v647
  %v760 = vadd.f32 %v696, %v648
  %v761 = vadd.f32 %v697, %v649
  %v762 = vadd.f32 %v698, %v650
  %v763 = vadd.f32 %v699, %v651
  %v764 = vadd.f32 %v700, %v652
  %v765 = vadd.f32 %v701, %v653
  %v766 = vadd.f32 %v702, %v646
  %v767 = vadd.f32 %v703, %v647
  %v768 = vadd.f32 %v704, %v648
  %v769 = vadd.f32 %v705, %v649
  %v770 = vadd.f32 %v706, %v650
  %v771 = vadd.f32 %v707, %v651
  %v772 = vadd.f32 %v708, %v652
  %v773 = vadd.f32 %v709, %v653
  %v774 = vadd.f32 %v710, %v646
  %v775 = vadd.f32 %v711, %v647
  %v776 = vadd.f32 %v712, %v648
  %v777 = vadd.f32 %v713, %v649
  %v778 = vadd.f32 %v714, %v650
  %v779 = vadd.f32 %v715, %v651
  %v780 = vadd.f32 %v716, %v652
  %v781 = vadd.f32 %v717, %v653
  %v782 = vmax.f32 %v718, -1.0
  %v783 = vmax.f32 %v719, -1.0
  %v784 = vmax.f32 %v720, -1.0
  %v785 = vmax.f32 %v721, -1.0
  %v786 = vmax.f32 %v722, -1.0
  %v787 = vmax.f32 %v723, -1.0
  %v788 = vmax.f32 %v724, -1.0
  %v789 = vmax.f32 %v725, -1.0
  %v790 = vmax.f32 %v726, -1.0
  %v791 = vmax.f32 %v727, -1.0
  %v792 = vmax.f32 %v728, -1.0
  %v793 = vmax.f32 %v729, -1.0
  %v794 = vmax.f32 %v730, -1.0
  %v795 = vmax.f32 %v731, -1.0
  %v796 = vmax.f32 %v732, -1.0
  %v797 = vmax.f32 %v733, -1.0
  %v798 = vmax.f32 %v734, -1.0
  %v799 = vmax.f32 %v735, -1.0
  %v800 = vmax.f32 %v736, -1.0
  %v801 = vmax.f32 %v737, -1.0
  %v802 = vmax.f32 %v738, -1.0
  %v803 = vmax.f32 %v739, -1.0
  %v804 = vmax.f32 %v740, -1.0
  %v805 = vmax.f32 %v741, -1.0
  %v806 = vmax.f32 %v742, -1.0
  %v807 = vmax.f32 %v743, -1.0
  %v808 = vmax.f32 %v744, -1.0
  %v809 = vmax.f32 %v745, -1.0
  %v810 = vmax.f32 %v746, -1.0
  %v811 = vmax.f32 %v747, -1.0
  %v812 = vmax.f32 %v748, -1.0
  %v813 = vmax.f32 %v749, -1.0
  %v814 = vmax.f32 %v750, -1.0
  %v815 = vmax.f32 %v751, -1.0
  %v816 = vmax.f32 %v752, -1.0
  %v817 = vmax.f32 %v753, -1.0
  %v818 = vmax.f32 %v754, -1.0
  %v819 = vmax.f32 %v755, -1.0
  %v820 = vmax.f32 %v756, -1.0
  %v821 = vmax.f32 %v757, -1.0
  %v822 = vmax.f32 %v758, -1.0
  %v823 = vmax.f32 %v759, -1.0
  %v824 = vmax.f32 %v760, -1.0
  %v825 = vmax.f32 %v761, -1.0
  %v826 = vmax.f32 %v762, -1.0
  %v827 = vmax.f32 %v763, -1.0
  %v828 = vmax.f32 %v764, -1.0
  %v829 = vmax.f32 %v765, -1.0
  %v830 = vmax.f32 %v766, -1.0
  %v831 = vmax.f32 %v767, -1.0
  %v832 = vmax.f32 %v768, -1.0
  %v833 = vmax.f32 %v769, -1.0
  %v834 = vmax.f32 %v770, -1.0
  %v835 = vmax.f32 %v771, -1.0
  %v836 = vmax.f32 %v772, -1.0
  %v837 = vmax.f32 %v773, -1.0
  %v838 = vmax.f32 %v774, -1.0
  %v839 = vmax.f32 %v775, -1.0
  %v840 = vmax.f32 %v776, -1.0
  %v841 = vmax.f32 %v777, -1.0
  %v842 = vmax.f32 %v778, -1.0
  %v843 = vmax.f32 %v779, -1.0
  %v844 = vmax.f32 %v780, -1.0
  %v845 = vmax.f32 %v781, -1.0
  %v846 = vmin.f32 %v782, 1.0
  %v847 = vmin.f32 %v783, 1.0
  %v848 = vmin.f32 %v784, 1.0
  %v849 = vmin.f32 %v785, 1.0
  %v850 = vmin.f32 %v786, 1.0
  %v851 = vmin.f32 %v787, 1.0
  %v852 = vmin.f32 %v788, 1.0
  %v853 = vmin.f32 %v789, 1.0
  %v854 = vmin.f32 %v790, 1.0
  %v855 = vmin.f32 %v791, 1.0
  %v856 = vmin.f32 %v792, 1.0
  %v857 = vmin.f32 %v793, 1.0
  %v858 = vmin.f32 %v794, 1.0
  %v859 = vmin.f32 %v795, 1.0
  %v860 = vmin.f32 %v796, 1.0
  %v861 = vmin.f32 %v797, 1.0
  %v862 = vmin.f32 %v798, 1.0
  %v863 = vmin.f32 %v799, 1.0
  %v864 = vmin.f32 %v800, 1.0
  %v865 = vmin.f32 %v801, 1.0
  %v866 = vmin.f32 %v802, 1.0
  %v867 = vmin.f32 %v803, 1.0
  %v868 = vmin.f32 %v804, 1.0
  %v869 = vmin.f32 %v805, 1.0
  %v870 = vmin.f32 %v806, 1.0
  %v871 = vmin.f32 %v807, 1.0
  %v872 = vmin.f32 %v808, 1.0
  %v873 = vmin.f32 %v809, 1.0
  %v874 = vmin.f32 %v810, 1.0
  %v875 = vmin.f32 %v811, 1.0
  %v876 = vmin.f32 %v812, 1.0
  %v877 = vmin.f32 %v813, 1.0
  %v878 = vmin.f32 %v814, 1.0
  %v879 = vmin.f32 %v815, 1.0
  %v880 = vmin.f32 %v816, 1.0
  %v881 = vmin.f32 %v817, 1.0
  %v882 = vmin.f32 %v818, 1.0
  %v883 = vmin.f32 %v819, 1.0
  %v884 = vmin.f32 %v820, 1.0
  %v885 = vmin.f32 %v821, 1.0
  %v886 = vmin.f32 %v822, 1.0
  %v887 = vmin.f32 %v823, 1.0
  %v888 = vmin.f32 %v824, 1.0
  %v889 = vmin.f32 %v825, 1.0
  %v890 = vmin.f32 %v826, 1.0
  %v891 = vmin.f32 %v827, 1.0
  %v892 = vmin.f32 %v828, 1.0
  %v893 = vmin.f32 %v829, 1.0
  %v894 = vmin.f32 %v830, 1.0
  %v895 = vmin.f32 %v831, 1.0
  %v896 = vmin.f32 %v832, 1.0
  %v897 = vmin.f32 %v833, 1.0
  %v898 = vmin.f32 %v834, 1.0
  %v899 = vmin.f32 %v835, 1.0
  %v900 = vmin.f32 %v836, 1.0
  %v901 = vmin.f32 %v837, 1.0
  %v902 = vmin.f32 %v838, 1.0
  %v903 = vmin.f32 %v839, 1.0
  %v904 = vmin.f32 %v840, 1.0
  %v905 = vmin.f32 %v841, 1.0
  %v906 = vmin.f32 %v842, 1.0
  %v907 = vmin.f32 %v843, 1.0
  %v908 = vmin.f32 %v844, 1.0
  %v909 = vmin.f32 %v845, 1.0
  %vm910 = vcmask 523264
  %911 = vst.msk [vmem:[%s5] sm:$0xff] %vm910, %v846
  %912 = vst.msk [vmem:[%s5 + $0x8] sm:$0xff] %vm910, %v847
  %913 = vst.msk [vmem:[%s5 + $0x10] sm:$0xff] %vm910, %v848
  %914 = vst.msk [vmem:[%s5 + $0x18] sm:$0xff] %vm910, %v849
  %915 = vst.msk [vmem:[%s5 + $0x20] sm:$0xff] %vm910, %v850
  %916 = vst.msk [vmem:[%s5 + $0x28] sm:$0xff] %vm910, %v851
  %917 = vst.msk [vmem:[%s5 + $0x30] sm:$0xff] %vm910, %v852
  %918 = vst.msk [vmem:[%s5 + $0x38] sm:$0xff] %vm910, %v853
  %919 = vst.msk [vmem:[%s5 + $0x40] sm:$0xff] %vm910, %v854
  %920 = vst.msk [vmem:[%s5 + $0x48] sm:$0xff] %vm910, %v855
  %921 = vst.msk [vmem:[%s5 + $0x50] sm:$0xff] %vm910, %v856
  %922 = vst.msk [vmem:[%s5 + $0x58] sm:$0xff] %vm910, %v857
  %923 = vst.msk [vmem:[%s5 + $0x60] sm:$0xff] %vm910, %v858
  %924 = vst.msk [vmem:[%s5 + $0x68] sm:$0xff] %vm910, %v859
  %925 = vst.msk [vmem:[%s5 + $0x70] sm:$0xff] %vm910, %v860
  %926 = vst.msk [vmem:[%s5 + $0x78] sm:$0xff] %vm910, %v861
  %927 = vst.msk [vmem:[%s5 + $0x80] sm:$0xff] %vm910, %v862
  %928 = vst.msk [vmem:[%s5 + $0x88] sm:$0xff] %vm910, %v863
  %929 = vst.msk [vmem:[%s5 + $0x90] sm:$0xff] %vm910, %v864
  %930 = vst.msk [vmem:[%s5 + $0x98] sm:$0xff] %vm910, %v865
  %931 = vst.msk [vmem:[%s5 + $0xa0] sm:$0xff] %vm910, %v866
  %932 = vst.msk [vmem:[%s5 + $0xa8] sm:$0xff] %vm910, %v867
  %933 = vst.msk [vmem:[%s5 + $0xb0] sm:$0xff] %vm910, %v868
  %934 = vst.msk [vmem:[%s5 + $0xb8] sm:$0xff] %vm910, %v869
  %935 = vst.msk [vmem:[%s5 + $0xc0] sm:$0xff] %vm910, %v870
  %936 = vst.msk [vmem:[%s5 + $0xc8] sm:$0xff] %vm910, %v871
  %937 = vst.msk [vmem:[%s5 + $0xd0] sm:$0xff] %vm910, %v872
  %938 = vst.msk [vmem:[%s5 + $0xd8] sm:$0xff] %vm910, %v873
  %939 = vst.msk [vmem:[%s5 + $0xe0] sm:$0xff] %vm910, %v874
  %940 = vst.msk [vmem:[%s5 + $0xe8] sm:$0xff] %vm910, %v875
  %941 = vst.msk [vmem:[%s5 + $0xf0] sm:$0xff] %vm910, %v876
  %942 = vst.msk [vmem:[%s5 + $0xf8] sm:$0xff] %vm910, %v877
  %943 = vst.msk [vmem:[%s5 + $0x100] sm:$0xff] %vm910, %v878
  %944 = vst.msk [vmem:[%s5 + $0x108] sm:$0xff] %vm910, %v879
  %945 = vst.msk [vmem:[%s5 + $0x110] sm:$0xff] %vm910, %v880
  %946 = vst.msk [vmem:[%s5 + $0x118] sm:$0xff] %vm910, %v881
  %947 = vst.msk [vmem:[%s5 + $0x120] sm:$0xff] %vm910, %v882
  %948 = vst.msk [vmem:[%s5 + $0x128] sm:$0xff] %vm910, %v883
  %949 = vst.msk [vmem:[%s5 + $0x130] sm:$0xff] %vm910, %v884
  %950 = vst.msk [vmem:[%s5 + $0x138] sm:$0xff] %vm910, %v885
  %951 = vst.msk [vmem:[%s5 + $0x140] sm:$0xff] %vm910, %v886
  %952 = vst.msk [vmem:[%s5 + $0x148] sm:$0xff] %vm910, %v887
  %953 = vst.msk [vmem:[%s5 + $0x150] sm:$0xff] %vm910, %v888
  %954 = vst.msk [vmem:[%s5 + $0x158] sm:$0xff] %vm910, %v889
  %955 = vst.msk [vmem:[%s5 + $0x160] sm:$0xff] %vm910, %v890
  %956 = vst.msk [vmem:[%s5 + $0x168] sm:$0xff] %vm910, %v891
  %957 = vst.msk [vmem:[%s5 + $0x170] sm:$0xff] %vm910, %v892
  %958 = vst.msk [vmem:[%s5 + $0x178] sm:$0xff] %vm910, %v893
  %959 = vst.msk [vmem:[%s5 + $0x180] sm:$0xff] %vm910, %v894
  %960 = vst.msk [vmem:[%s5 + $0x188] sm:$0xff] %vm910, %v895
  %961 = vst.msk [vmem:[%s5 + $0x190] sm:$0xff] %vm910, %v896
  %962 = vst.msk [vmem:[%s5 + $0x198] sm:$0xff] %vm910, %v897
  %963 = vst.msk [vmem:[%s5 + $0x1a0] sm:$0xff] %vm910, %v898
  %964 = vst.msk [vmem:[%s5 + $0x1a8] sm:$0xff] %vm910, %v899
  %965 = vst.msk [vmem:[%s5 + $0x1b0] sm:$0xff] %vm910, %v900
  %966 = vst.msk [vmem:[%s5 + $0x1b8] sm:$0xff] %vm910, %v901
  %967 = vst.msk [vmem:[%s5 + $0x1c0] sm:$0xff] %vm910, %v902
  %968 = vst.msk [vmem:[%s5 + $0x1c8] sm:$0xff] %vm910, %v903
  %969 = vst.msk [vmem:[%s5 + $0x1d0] sm:$0xff] %vm910, %v904
  %970 = vst.msk [vmem:[%s5 + $0x1d8] sm:$0xff] %vm910, %v905
  %971 = vst.msk [vmem:[%s5 + $0x1e0] sm:$0xff] %vm910, %v906
  %972 = vst.msk [vmem:[%s5 + $0x1e8] sm:$0xff] %vm910, %v907
  %973 = vst.msk [vmem:[%s5 + $0x1f0] sm:$0xff] %vm910, %v908
  %974 = vst.msk [vmem:[%s5 + $0x1f8] sm:$0xff] %vm910, %v909
  %v975 = vld [vmem:[#allocation2] sm:$0x3]
  %v976 = vld [vmem:[#allocation2 + $0x2] sm:$0x3]
  %v977 = vld [vmem:[#allocation2 + $0x4] sm:$0x3]
  %v978 = vld [vmem:[#allocation2 + $0x6] sm:$0x3]
  %v979 = vld [vmem:[#allocation2 + $0x8] sm:$0x3]
  %v980 = vld [vmem:[#allocation2 + $0xa] sm:$0x3]
  %v981 = vld [vmem:[#allocation2 + $0xc] sm:$0x3]
  %v982 = vld [vmem:[#allocation2 + $0xe] sm:$0x3]
  %v984 = vsel %vm910, %v975, 0
  %986 = vmatprep.subr.mxu0 0.0
  %987 = vmatpush1.msra.mxu0 0.0
  %988 = vmatprep.subr.mxu0 0.0
  %989 = vmatpush1.msra.mxu0 0.0
  %990 = vmatprep.subr.mxu0 0.0
  %991 = vmatpush1.msra.mxu0 0.0
  %992 = vmatprep.subr.mxu0 0.0
  %993 = vmatpush1.msra.mxu0 0.0
  %994 = vmatprep.subr.mxu0 0.0
  %995 = vmatpush1.msra.mxu0 0.0
  %996 = vmatprep.subr.mxu0 0.0
  %997 = vmatpush1.msra.mxu0 0.0
  %998 = vmatprep.subr.mxu0 0.0
  %999 = vmatpush1.msra.mxu0 0.0
  %1000 = vmatprep.subr.mxu0 0.0
  %1001 = vmatpush1.msra.mxu0 0.0
  %1002 = vmatprep.subr.mxu0 0.0
  %1003 = vmatpush1.msra.mxu0 %v853
  %1004 = vmatprep.subr.mxu0 0.0
  %1005 = vmatpush1.msra.mxu0 %v852
  %1006 = vmatprep.subr.mxu0 0.0
  %1007 = vmatpush1.msra.mxu0 %v851
  %1008 = vmatprep.subr.mxu0 0.0
  %1009 = vmatpush1.msra.mxu0 %v850
  %1010 = vmatprep.subr.mxu0 0.0
  %1011 = vmatpush1.msra.mxu0 %v849
  %1012 = vmatprep.subr.mxu0 0.0
  %1013 = vmatpush1.msra.mxu0 %v848
  %1014 = vmatprep.subr.mxu0 0.0
  %1015 = vmatpush1.msra.mxu0 %v847
  %1016 = vmatprep.subr.mxu0 0.0
  %1017 = vmatpush1.msra.mxu0 %v846
  %1018 = vmatprep.subr.mxu0 0.0
  %1019 = vmatpush2.msra.mxu0 0.0
  %1020 = vmatprep.subr.mxu0 0.0
  %1021 = vmatpush2.msra.mxu0 0.0
  %1022 = vmatprep.subr.mxu0 0.0
  %1023 = vmatpush2.msra.mxu0 0.0
  %1024 = vmatprep.subr.mxu0 0.0
  %1025 = vmatpush2.msra.mxu0 0.0
  %1026 = vmatprep.subr.mxu0 0.0
  %1027 = vmatpush2.msra.mxu0 0.0
  %1028 = vmatprep.subr.mxu0 0.0
  %1029 = vmatpush2.msra.mxu0 0.0
  %1030 = vmatprep.subr.mxu0 0.0
  %1031 = vmatpush2.msra.mxu0 0.0
  %1032 = vmatprep.subr.mxu0 0.0
  %1033 = vmatpush2.msra.mxu0 0.0
  %1034 = vmatprep.subr.mxu0 0.0
  %1035 = vmatpush2.msra.mxu0 0.0
  %1036 = vmatprep.subr.mxu0 0.0
  %1037 = vmatpush2.msra.mxu0 0.0
  %1038 = vmatprep.subr.mxu0 0.0
  %1039 = vmatpush2.msra.mxu0 0.0
  %1040 = vmatprep.subr.mxu0 0.0
  %1041 = vmatpush2.msra.mxu0 0.0
  %1042 = vmatprep.subr.mxu0 0.0
  %1043 = vmatpush2.msra.mxu0 0.0
  %1044 = vmatprep.subr.mxu0 0.0
  %1045 = vmatpush2.msra.mxu0 0.0
  %1046 = vmatprep.subr.mxu0 0.0
  %1047 = vmatpush2.msra.mxu0 0.0
  %1048 = vmatprep.subr.mxu0 0.0
  %1049 = vmatpush2.msra.mxu0 0.0
  %1050 = vmatprep.mubr.f32.mxu0 0.0
  %1051 = vmatmul.mubr.f32.gmra.mxu0 %v984
  %v1052 = vpop.f32.mrf.mxu0
  %v1053 = vadd.f32 0.0, %v1052
  %v1054 = vpop.f32.mrf.mxu0
  %1055 = vdwg.mxu0
  %v1057 = vsel %vm910, %v976, 0
  %1059 = vmatprep.subr.mxu0 0.0
  %1060 = vmatpush1.msra.mxu0 0.0
  %1061 = vmatprep.subr.mxu0 0.0
  %1062 = vmatpush1.msra.mxu0 0.0
  %1063 = vmatprep.subr.mxu0 0.0
  %1064 = vmatpush1.msra.mxu0 0.0
  %1065 = vmatprep.subr.mxu0 0.0
  %1066 = vmatpush1.msra.mxu0 0.0
  %1067 = vmatprep.subr.mxu0 0.0
  %1068 = vmatpush1.msra.mxu0 0.0
  %1069 = vmatprep.subr.mxu0 0.0
  %1070 = vmatpush1.msra.mxu0 0.0
  %1071 = vmatprep.subr.mxu0 0.0
  %1072 = vmatpush1.msra.mxu0 0.0
  %1073 = vmatprep.subr.mxu0 0.0
  %1074 = vmatpush1.msra.mxu0 0.0
  %1075 = vmatprep.subr.mxu0 0.0
  %1076 = vmatpush1.msra.mxu0 %v861
  %1077 = vmatprep.subr.mxu0 0.0
  %1078 = vmatpush1.msra.mxu0 %v860
  %1079 = vmatprep.subr.mxu0 0.0
  %1080 = vmatpush1.msra.mxu0 %v859
  %1081 = vmatprep.subr.mxu0 0.0
  %1082 = vmatpush1.msra.mxu0 %v858
  %1083 = vmatprep.subr.mxu0 0.0
  %1084 = vmatpush1.msra.mxu0 %v857
  %1085 = vmatprep.subr.mxu0 0.0
  %1086 = vmatpush1.msra.mxu0 %v856
  %1087 = vmatprep.subr.mxu0 0.0
  %1088 = vmatpush1.msra.mxu0 %v855
  %1089 = vmatprep.subr.mxu0 0.0
  %1090 = vmatpush1.msra.mxu0 %v854
  %1091 = vmatprep.subr.mxu0 0.0
  %1092 = vmatpush2.msra.mxu0 0.0
  %1093 = vmatprep.subr.mxu0 0.0
  %1094 = vmatpush2.msra.mxu0 0.0
  %1095 = vmatprep.subr.mxu0 0.0
  %1096 = vmatpush2.msra.mxu0 0.0
  %1097 = vmatprep.subr.mxu0 0.0
  %1098 = vmatpush2.msra.mxu0 0.0
  %1099 = vmatprep.subr.mxu0 0.0
  %1100 = vmatpush2.msra.mxu0 0.0
  %1101 = vmatprep.subr.mxu0 0.0
  %1102 = vmatpush2.msra.mxu0 0.0
  %1103 = vmatprep.subr.mxu0 0.0
  %1104 = vmatpush2.msra.mxu0 0.0
  %1105 = vmatprep.subr.mxu0 0.0
  %1106 = vmatpush2.msra.mxu0 0.0
  %1107 = vmatprep.subr.mxu0 0.0
  %1108 = vmatpush2.msra.mxu0 0.0
  %1109 = vmatprep.subr.mxu0 0.0
  %1110 = vmatpush2.msra.mxu0 0.0
  %1111 = vmatprep.subr.mxu0 0.0
  %1112 = vmatpush2.msra.mxu0 0.0
  %1113 = vmatprep.subr.mxu0 0.0
  %1114 = vmatpush2.msra.mxu0 0.0
  %1115 = vmatprep.subr.mxu0 0.0
  %1116 = vmatpush2.msra.mxu0 0.0
  %1117 = vmatprep.subr.mxu0 0.0
  %1118 = vmatpush2.msra.mxu0 0.0
  %1119 = vmatprep.subr.mxu0 0.0
  %1120 = vmatpush2.msra.mxu0 0.0
  %1121 = vmatprep.subr.mxu0 0.0
  %1122 = vmatpush2.msra.mxu0 0.0
  %1123 = vmatprep.mubr.f32.mxu0 0.0
  %1124 = vmatmul.mubr.f32.gmra.mxu0 %v1057
  %v1125 = vpop.f32.mrf.mxu0
  %v1126 = vadd.f32 0.0, %v1125
  %v1127 = vpop.f32.mrf.mxu0
  %1128 = vdwg.mxu0
  %v1130 = vsel %vm910, %v977, 0
  %1132 = vmatprep.subr.mxu0 0.0
  %1133 = vmatpush1.msra.mxu0 0.0
  %1134 = vmatprep.subr.mxu0 0.0
  %1135 = vmatpush1.msra.mxu0 0.0
  %1136 = vmatprep.subr.mxu0 0.0
  %1137 = vmatpush1.msra.mxu0 0.0
  %1138 = vmatprep.subr.mxu0 0.0
  %1139 = vmatpush1.msra.mxu0 0.0
  %1140 = vmatprep.subr.mxu0 0.0
  %1141 = vmatpush1.msra.mxu0 0.0
  %1142 = vmatprep.subr.mxu0 0.0
  %1143 = vmatpush1.msra.mxu0 0.0
  %1144 = vmatprep.subr.mxu0 0.0
  %1145 = vmatpush1.msra.mxu0 0.0
  %1146 = vmatprep.subr.mxu0 0.0
  %1147 = vmatpush1.msra.mxu0 0.0
  %1148 = vmatprep.subr.mxu0 0.0
  %1149 = vmatpush1.msra.mxu0 %v869
  %1150 = vmatprep.subr.mxu0 0.0
  %1151 = vmatpush1.msra.mxu0 %v868
  %1152 = vmatprep.subr.mxu0 0.0
  %1153 = vmatpush1.msra.mxu0 %v867
  %1154 = vmatprep.subr.mxu0 0.0
  %1155 = vmatpush1.msra.mxu0 %v866
  %1156 = vmatprep.subr.mxu0 0.0
  %1157 = vmatpush1.msra.mxu0 %v865
  %1158 = vmatprep.subr.mxu0 0.0
  %1159 = vmatpush1.msra.mxu0 %v864
  %1160 = vmatprep.subr.mxu0 0.0
  %1161 = vmatpush1.msra.mxu0 %v863
  %1162 = vmatprep.subr.mxu0 0.0
  %1163 = vmatpush1.msra.mxu0 %v862
  %1164 = vmatprep.subr.mxu0 0.0
  %1165 = vmatpush2.msra.mxu0 0.0
  %1166 = vmatprep.subr.mxu0 0.0
  %1167 = vmatpush2.msra.mxu0 0.0
  %1168 = vmatprep.subr.mxu0 0.0
  %1169 = vmatpush2.msra.mxu0 0.0
  %1170 = vmatprep.subr.mxu0 0.0
  %1171 = vmatpush2.msra.mxu0 0.0
  %1172 = vmatprep.subr.mxu0 0.0
  %1173 = vmatpush2.msra.mxu0 0.0
  %1174 = vmatprep.subr.mxu0 0.0
  %1175 = vmatpush2.msra.mxu0 0.0
  %1176 = vmatprep.subr.mxu0 0.0
  %1177 = vmatpush2.msra.mxu0 0.0
  %1178 = vmatprep.subr.mxu0 0.0
  %1179 = vmatpush2.msra.mxu0 0.0
  %1180 = vmatprep.subr.mxu0 0.0
  %1181 = vmatpush2.msra.mxu0 0.0
  %1182 = vmatprep.subr.mxu0 0.0
  %1183 = vmatpush2.msra.mxu0 0.0
  %1184 = vmatprep.subr.mxu0 0.0
  %1185 = vmatpush2.msra.mxu0 0.0
  %1186 = vmatprep.subr.mxu0 0.0
  %1187 = vmatpush2.msra.mxu0 0.0
  %1188 = vmatprep.subr.mxu0 0.0
  %1189 = vmatpush2.msra.mxu0 0.0
  %1190 = vmatprep.subr.mxu0 0.0
  %1191 = vmatpush2.msra.mxu0 0.0
  %1192 = vmatprep.subr.mxu0 0.0
  %1193 = vmatpush2.msra.mxu0 0.0
  %1194 = vmatprep.subr.mxu0 0.0
  %1195 = vmatpush2.msra.mxu0 0.0
  %1196 = vmatprep.mubr.f32.mxu0 0.0
  %1197 = vmatmul.mubr.f32.gmra.mxu0 %v1130
  %v1198 = vpop.f32.mrf.mxu0
  %v1199 = vadd.f32 0.0, %v1198
  %v1200 = vpop.f32.mrf.mxu0
  %1201 = vdwg.mxu0
  %v1203 = vsel %vm910, %v978, 0
  %1205 = vmatprep.subr.mxu0 0.0
  %1206 = vmatpush1.msra.mxu0 0.0
  %1207 = vmatprep.subr.mxu0 0.0
  %1208 = vmatpush1.msra.mxu0 0.0
  %1209 = vmatprep.subr.mxu0 0.0
  %1210 = vmatpush1.msra.mxu0 0.0
  %1211 = vmatprep.subr.mxu0 0.0
  %1212 = vmatpush1.msra.mxu0 0.0
  %1213 = vmatprep.subr.mxu0 0.0
  %1214 = vmatpush1.msra.mxu0 0.0
  %1215 = vmatprep.subr.mxu0 0.0
  %1216 = vmatpush1.msra.mxu0 0.0
  %1217 = vmatprep.subr.mxu0 0.0
  %1218 = vmatpush1.msra.mxu0 0.0
  %1219 = vmatprep.subr.mxu0 0.0
  %1220 = vmatpush1.msra.mxu0 0.0
  %1221 = vmatprep.subr.mxu0 0.0
  %1222 = vmatpush1.msra.mxu0 %v877
  %1223 = vmatprep.subr.mxu0 0.0
  %1224 = vmatpush1.msra.mxu0 %v876
  %1225 = vmatprep.subr.mxu0 0.0
  %1226 = vmatpush1.msra.mxu0 %v875
  %1227 = vmatprep.subr.mxu0 0.0
  %1228 = vmatpush1.msra.mxu0 %v874
  %1229 = vmatprep.subr.mxu0 0.0
  %1230 = vmatpush1.msra.mxu0 %v873
  %1231 = vmatprep.subr.mxu0 0.0
  %1232 = vmatpush1.msra.mxu0 %v872
  %1233 = vmatprep.subr.mxu0 0.0
  %1234 = vmatpush1.msra.mxu0 %v871
  %1235 = vmatprep.subr.mxu0 0.0
  %1236 = vmatpush1.msra.mxu0 %v870
  %1237 = vmatprep.subr.mxu0 0.0
  %1238 = vmatpush2.msra.mxu0 0.0
  %1239 = vmatprep.subr.mxu0 0.0
  %1240 = vmatpush2.msra.mxu0 0.0
  %1241 = vmatprep.subr.mxu0 0.0
  %1242 = vmatpush2.msra.mxu0 0.0
  %1243 = vmatprep.subr.mxu0 0.0
  %1244 = vmatpush2.msra.mxu0 0.0
  %1245 = vmatprep.subr.mxu0 0.0
  %1246 = vmatpush2.msra.mxu0 0.0
  %1247 = vmatprep.subr.mxu0 0.0
  %1248 = vmatpush2.msra.mxu0 0.0
  %1249 = vmatprep.subr.mxu0 0.0
  %1250 = vmatpush2.msra.mxu0 0.0
  %1251 = vmatprep.subr.mxu0 0.0
  %1252 = vmatpush2.msra.mxu0 0.0
  %1253 = vmatprep.subr.mxu0 0.0
  %1254 = vmatpush2.msra.mxu0 0.0
  %1255 = vmatprep.subr.mxu0 0.0
  %1256 = vmatpush2.msra.mxu0 0.0
  %1257 = vmatprep.subr.mxu0 0.0
  %1258 = vmatpush2.msra.mxu0 0.0
  %1259 = vmatprep.subr.mxu0 0.0
  %1260 = vmatpush2.msra.mxu0 0.0
  %1261 = vmatprep.subr.mxu0 0.0
  %1262 = vmatpush2.msra.mxu0 0.0
  %1263 = vmatprep.subr.mxu0 0.0
  %1264 = vmatpush2.msra.mxu0 0.0
  %1265 = vmatprep.subr.mxu0 0.0
  %1266 = vmatpush2.msra.mxu0 0.0
  %1267 = vmatprep.subr.mxu0 0.0
  %1268 = vmatpush2.msra.mxu0 0.0
  %1269 = vmatprep.mubr.f32.mxu0 0.0
  %1270 = vmatmul.mubr.f32.gmra.mxu0 %v1203
  %v1271 = vpop.f32.mrf.mxu0
  %v1272 = vadd.f32 0.0, %v1271
  %v1273 = vpop.f32.mrf.mxu0
  %1274 = vdwg.mxu0
  %v1276 = vsel %vm910, %v979, 0
  %1278 = vmatprep.subr.mxu0 0.0
  %1279 = vmatpush1.msra.mxu0 0.0
  %1280 = vmatprep.subr.mxu0 0.0
  %1281 = vmatpush1.msra.mxu0 0.0
  %1282 = vmatprep.subr.mxu0 0.0
  %1283 = vmatpush1.msra.mxu0 0.0
  %1284 = vmatprep.subr.mxu0 0.0
  %1285 = vmatpush1.msra.mxu0 0.0
  %1286 = vmatprep.subr.mxu0 0.0
  %1287 = vmatpush1.msra.mxu0 0.0
  %1288 = vmatprep.subr.mxu0 0.0
  %1289 = vmatpush1.msra.mxu0 0.0
  %1290 = vmatprep.subr.mxu0 0.0
  %1291 = vmatpush1.msra.mxu0 0.0
  %1292 = vmatprep.subr.mxu0 0.0
  %1293 = vmatpush1.msra.mxu0 0.0
  %1294 = vmatprep.subr.mxu0 0.0
  %1295 = vmatpush1.msra.mxu0 %v885
  %1296 = vmatprep.subr.mxu0 0.0
  %1297 = vmatpush1.msra.mxu0 %v884
  %1298 = vmatprep.subr.mxu0 0.0
  %1299 = vmatpush1.msra.mxu0 %v883
  %1300 = vmatprep.subr.mxu0 0.0
  %1301 = vmatpush1.msra.mxu0 %v882
  %1302 = vmatprep.subr.mxu0 0.0
  %1303 = vmatpush1.msra.mxu0 %v881
  %1304 = vmatprep.subr.mxu0 0.0
  %1305 = vmatpush1.msra.mxu0 %v880
  %1306 = vmatprep.subr.mxu0 0.0
  %1307 = vmatpush1.msra.mxu0 %v879
  %1308 = vmatprep.subr.mxu0 0.0
  %1309 = vmatpush1.msra.mxu0 %v878
  %1310 = vmatprep.subr.mxu0 0.0
  %1311 = vmatpush2.msra.mxu0 0.0
  %1312 = vmatprep.subr.mxu0 0.0
  %1313 = vmatpush2.msra.mxu0 0.0
  %1314 = vmatprep.subr.mxu0 0.0
  %1315 = vmatpush2.msra.mxu0 0.0
  %1316 = vmatprep.subr.mxu0 0.0
  %1317 = vmatpush2.msra.mxu0 0.0
  %1318 = vmatprep.subr.mxu0 0.0
  %1319 = vmatpush2.msra.mxu0 0.0
  %1320 = vmatprep.subr.mxu0 0.0
  %1321 = vmatpush2.msra.mxu0 0.0
  %1322 = vmatprep.subr.mxu0 0.0
  %1323 = vmatpush2.msra.mxu0 0.0
  %1324 = vmatprep.subr.mxu0 0.0
  %1325 = vmatpush2.msra.mxu0 0.0
  %1326 = vmatprep.subr.mxu0 0.0
  %1327 = vmatpush2.msra.mxu0 0.0
  %1328 = vmatprep.subr.mxu0 0.0
  %1329 = vmatpush2.msra.mxu0 0.0
  %1330 = vmatprep.subr.mxu0 0.0
  %1331 = vmatpush2.msra.mxu0 0.0
  %1332 = vmatprep.subr.mxu0 0.0
  %1333 = vmatpush2.msra.mxu0 0.0
  %1334 = vmatprep.subr.mxu0 0.0
  %1335 = vmatpush2.msra.mxu0 0.0
  %1336 = vmatprep.subr.mxu0 0.0
  %1337 = vmatpush2.msra.mxu0 0.0
  %1338 = vmatprep.subr.mxu0 0.0
  %1339 = vmatpush2.msra.mxu0 0.0
  %1340 = vmatprep.subr.mxu0 0.0
  %1341 = vmatpush2.msra.mxu0 0.0
  %1342 = vmatprep.mubr.f32.mxu0 0.0
  %1343 = vmatmul.mubr.f32.gmra.mxu0 %v1276
  %v1344 = vpop.f32.mrf.mxu0
  %v1345 = vadd.f32 0.0, %v1344
  %v1346 = vpop.f32.mrf.mxu0
  %1347 = vdwg.mxu0
  %v1349 = vsel %vm910, %v980, 0
  %1351 = vmatprep.subr.mxu0 0.0
  %1352 = vmatpush1.msra.mxu0 0.0
  %1353 = vmatprep.subr.mxu0 0.0
  %1354 = vmatpush1.msra.mxu0 0.0
  %1355 = vmatprep.subr.mxu0 0.0
  %1356 = vmatpush1.msra.mxu0 0.0
  %1357 = vmatprep.subr.mxu0 0.0
  %1358 = vmatpush1.msra.mxu0 0.0
  %1359 = vmatprep.subr.mxu0 0.0
  %1360 = vmatpush1.msra.mxu0 0.0
  %1361 = vmatprep.subr.mxu0 0.0
  %1362 = vmatpush1.msra.mxu0 0.0
  %1363 = vmatprep.subr.mxu0 0.0
  %1364 = vmatpush1.msra.mxu0 0.0
  %1365 = vmatprep.subr.mxu0 0.0
  %1366 = vmatpush1.msra.mxu0 0.0
  %1367 = vmatprep.subr.mxu0 0.0
  %1368 = vmatpush1.msra.mxu0 %v893
  %1369 = vmatprep.subr.mxu0 0.0
  %1370 = vmatpush1.msra.mxu0 %v892
  %1371 = vmatprep.subr.mxu0 0.0
  %1372 = vmatpush1.msra.mxu0 %v891
  %1373 = vmatprep.subr.mxu0 0.0
  %1374 = vmatpush1.msra.mxu0 %v890
  %1375 = vmatprep.subr.mxu0 0.0
  %1376 = vmatpush1.msra.mxu0 %v889
  %1377 = vmatprep.subr.mxu0 0.0
  %1378 = vmatpush1.msra.mxu0 %v888
  %1379 = vmatprep.subr.mxu0 0.0
  %1380 = vmatpush1.msra.mxu0 %v887
  %1381 = vmatprep.subr.mxu0 0.0
  %1382 = vmatpush1.msra.mxu0 %v886
  %1383 = vmatprep.subr.mxu0 0.0
  %1384 = vmatpush2.msra.mxu0 0.0
  %1385 = vmatprep.subr.mxu0 0.0
  %1386 = vmatpush2.msra.mxu0 0.0
  %1387 = vmatprep.subr.mxu0 0.0
  %1388 = vmatpush2.msra.mxu0 0.0
  %1389 = vmatprep.subr.mxu0 0.0
  %1390 = vmatpush2.msra.mxu0 0.0
  %1391 = vmatprep.subr.mxu0 0.0
  %1392 = vmatpush2.msra.mxu0 0.0
  %1393 = vmatprep.subr.mxu0 0.0
  %1394 = vmatpush2.msra.mxu0 0.0
  %1395 = vmatprep.subr.mxu0 0.0
  %1396 = vmatpush2.msra.mxu0 0.0
  %1397 = vmatprep.subr.mxu0 0.0
  %1398 = vmatpush2.msra.mxu0 0.0
  %1399 = vmatprep.subr.mxu0 0.0
  %1400 = vmatpush2.msra.mxu0 0.0
  %1401 = vmatprep.subr.mxu0 0.0
  %1402 = vmatpush2.msra.mxu0 0.0
  %1403 = vmatprep.subr.mxu0 0.0
  %1404 = vmatpush2.msra.mxu0 0.0
  %1405 = vmatprep.subr.mxu0 0.0
  %1406 = vmatpush2.msra.mxu0 0.0
  %1407 = vmatprep.subr.mxu0 0.0
  %1408 = vmatpush2.msra.mxu0 0.0
  %1409 = vmatprep.subr.mxu0 0.0
  %1410 = vmatpush2.msra.mxu0 0.0
  %1411 = vmatprep.subr.mxu0 0.0
  %1412 = vmatpush2.msra.mxu0 0.0
  %1413 = vmatprep.subr.mxu0 0.0
  %1414 = vmatpush2.msra.mxu0 0.0
  %1415 = vmatprep.mubr.f32.mxu0 0.0
  %1416 = vmatmul.mubr.f32.gmra.mxu0 %v1349
  %v1417 = vpop.f32.mrf.mxu0
  %v1418 = vadd.f32 0.0, %v1417
  %v1419 = vpop.f32.mrf.mxu0
  %1420 = vdwg.mxu0
  %v1422 = vsel %vm910, %v981, 0
  %1424 = vmatprep.subr.mxu0 0.0
  %1425 = vmatpush1.msra.mxu0 0.0
  %1426 = vmatprep.subr.mxu0 0.0
  %1427 = vmatpush1.msra.mxu0 0.0
  %1428 = vmatprep.subr.mxu0 0.0
  %1429 = vmatpush1.msra.mxu0 0.0
  %1430 = vmatprep.subr.mxu0 0.0
  %1431 = vmatpush1.msra.mxu0 0.0
  %1432 = vmatprep.subr.mxu0 0.0
  %1433 = vmatpush1.msra.mxu0 0.0
  %1434 = vmatprep.subr.mxu0 0.0
  %1435 = vmatpush1.msra.mxu0 0.0
  %1436 = vmatprep.subr.mxu0 0.0
  %1437 = vmatpush1.msra.mxu0 0.0
  %1438 = vmatprep.subr.mxu0 0.0
  %1439 = vmatpush1.msra.mxu0 0.0
  %1440 = vmatprep.subr.mxu0 0.0
  %1441 = vmatpush1.msra.mxu0 %v901
  %1442 = vmatprep.subr.mxu0 0.0
  %1443 = vmatpush1.msra.mxu0 %v900
  %1444 = vmatprep.subr.mxu0 0.0
  %1445 = vmatpush1.msra.mxu0 %v899
  %1446 = vmatprep.subr.mxu0 0.0
  %1447 = vmatpush1.msra.mxu0 %v898
  %1448 = vmatprep.subr.mxu0 0.0
  %1449 = vmatpush1.msra.mxu0 %v897
  %1450 = vmatprep.subr.mxu0 0.0
  %1451 = vmatpush1.msra.mxu0 %v896
  %1452 = vmatprep.subr.mxu0 0.0
  %1453 = vmatpush1.msra.mxu0 %v895
  %1454 = vmatprep.subr.mxu0 0.0
  %1455 = vmatpush1.msra.mxu0 %v894
  %1456 = vmatprep.subr.mxu0 0.0
  %1457 = vmatpush2.msra.mxu0 0.0
  %1458 = vmatprep.subr.mxu0 0.0
  %1459 = vmatpush2.msra.mxu0 0.0
  %1460 = vmatprep.subr.mxu0 0.0
  %1461 = vmatpush2.msra.mxu0 0.0
  %1462 = vmatprep.subr.mxu0 0.0
  %1463 = vmatpush2.msra.mxu0 0.0
  %1464 = vmatprep.subr.mxu0 0.0
  %1465 = vmatpush2.msra.mxu0 0.0
  %1466 = vmatprep.subr.mxu0 0.0
  %1467 = vmatpush2.msra.mxu0 0.0
  %1468 = vmatprep.subr.mxu0 0.0
  %1469 = vmatpush2.msra.mxu0 0.0
  %1470 = vmatprep.subr.mxu0 0.0
  %1471 = vmatpush2.msra.mxu0 0.0
  %1472 = vmatprep.subr.mxu0 0.0
  %1473 = vmatpush2.msra.mxu0 0.0
  %1474 = vmatprep.subr.mxu0 0.0
  %1475 = vmatpush2.msra.mxu0 0.0
  %1476 = vmatprep.subr.mxu0 0.0
  %1477 = vmatpush2.msra.mxu0 0.0
  %1478 = vmatprep.subr.mxu0 0.0
  %1479 = vmatpush2.msra.mxu0 0.0
  %1480 = vmatprep.subr.mxu0 0.0
  %1481 = vmatpush2.msra.mxu0 0.0
  %1482 = vmatprep.subr.mxu0 0.0
  %1483 = vmatpush2.msra.mxu0 0.0
  %1484 = vmatprep.subr.mxu0 0.0
  %1485 = vmatpush2.msra.mxu0 0.0
  %1486 = vmatprep.subr.mxu0 0.0
  %1487 = vmatpush2.msra.mxu0 0.0
  %1488 = vmatprep.mubr.f32.mxu0 0.0
  %1489 = vmatmul.mubr.f32.gmra.mxu0 %v1422
  %v1490 = vpop.f32.mrf.mxu0
  %v1491 = vadd.f32 0.0, %v1490
  %v1492 = vpop.f32.mrf.mxu0
  %1493 = vdwg.mxu0
  %v1495 = vsel %vm910, %v982, 0
  %1497 = vmatprep.subr.mxu0 0.0
  %1498 = vmatpush1.msra.mxu0 0.0
  %1499 = vmatprep.subr.mxu0 0.0
  %1500 = vmatpush1.msra.mxu0 0.0
  %1501 = vmatprep.subr.mxu0 0.0
  %1502 = vmatpush1.msra.mxu0 0.0
  %1503 = vmatprep.subr.mxu0 0.0
  %1504 = vmatpush1.msra.mxu0 0.0
  %1505 = vmatprep.subr.mxu0 0.0
  %1506 = vmatpush1.msra.mxu0 0.0
  %1507 = vmatprep.subr.mxu0 0.0
  %1508 = vmatpush1.msra.mxu0 0.0
  %1509 = vmatprep.subr.mxu0 0.0
  %1510 = vmatpush1.msra.mxu0 0.0
  %1511 = vmatprep.subr.mxu0 0.0
  %1512 = vmatpush1.msra.mxu0 0.0
  %1513 = vmatprep.subr.mxu0 0.0
  %1514 = vmatpush1.msra.mxu0 %v909
  %1515 = vmatprep.subr.mxu0 0.0
  %1516 = vmatpush1.msra.mxu0 %v908
  %1517 = vmatprep.subr.mxu0 0.0
  %1518 = vmatpush1.msra.mxu0 %v907
  %1519 = vmatprep.subr.mxu0 0.0
  %1520 = vmatpush1.msra.mxu0 %v906
  %1521 = vmatprep.subr.mxu0 0.0
  %1522 = vmatpush1.msra.mxu0 %v905
  %1523 = vmatprep.subr.mxu0 0.0
  %1524 = vmatpush1.msra.mxu0 %v904
  %1525 = vmatprep.subr.mxu0 0.0
  %1526 = vmatpush1.msra.mxu0 %v903
  %1527 = vmatprep.subr.mxu0 0.0
  %1528 = vmatpush1.msra.mxu0 %v902
  %1529 = vmatprep.subr.mxu0 0.0
  %1530 = vmatpush2.msra.mxu0 0.0
  %1531 = vmatprep.subr.mxu0 0.0
  %1532 = vmatpush2.msra.mxu0 0.0
  %1533 = vmatprep.subr.mxu0 0.0
  %1534 = vmatpush2.msra.mxu0 0.0
  %1535 = vmatprep.subr.mxu0 0.0
  %1536 = vmatpush2.msra.mxu0 0.0
  %1537 = vmatprep.subr.mxu0 0.0
  %1538 = vmatpush2.msra.mxu0 0.0
  %1539 = vmatprep.subr.mxu0 0.0
  %1540 = vmatpush2.msra.mxu0 0.0
  %1541 = vmatprep.subr.mxu0 0.0
  %1542 = vmatpush2.msra.mxu0 0.0
  %1543 = vmatprep.subr.mxu0 0.0
  %1544 = vmatpush2.msra.mxu0 0.0
  %1545 = vmatprep.subr.mxu0 0.0
  %1546 = vmatpush2.msra.mxu0 0.0
  %1547 = vmatprep.subr.mxu0 0.0
  %1548 = vmatpush2.msra.mxu0 0.0
  %1549 = vmatprep.subr.mxu0 0.0
  %1550 = vmatpush2.msra.mxu0 0.0
  %1551 = vmatprep.subr.mxu0 0.0
  %1552 = vmatpush2.msra.mxu0 0.0
  %1553 = vmatprep.subr.mxu0 0.0
  %1554 = vmatpush2.msra.mxu0 0.0
  %1555 = vmatprep.subr.mxu0 0.0
  %1556 = vmatpush2.msra.mxu0 0.0
  %1557 = vmatprep.subr.mxu0 0.0
  %1558 = vmatpush2.msra.mxu0 0.0
  %1559 = vmatprep.subr.mxu0 0.0
  %1560 = vmatpush2.msra.mxu0 0.0
  %1561 = vmatprep.mubr.f32.mxu0 0.0
  %1562 = vmatmul.mubr.f32.gmra.mxu0 %v1495
  %v1563 = vpop.f32.mrf.mxu0
  %v1564 = vadd.f32 0.0, %v1563
  %v1565 = vpop.f32.mrf.mxu0
  %1566 = vdwg.mxu0
  %v1567 = vadd.f32 %v975, %v1053
  %v1568 = vadd.f32 %v976, %v1126
  %v1569 = vadd.f32 %v977, %v1199
  %v1570 = vadd.f32 %v978, %v1272
  %v1571 = vadd.f32 %v979, %v1345
  %v1572 = vadd.f32 %v980, %v1418
  %v1573 = vadd.f32 %v981, %v1491
  %v1574 = vadd.f32 %v982, %v1564
  %vm1575 = vcmask 517120
  %1576 = vst.msk [vmem:[#allocation2] sm:$0x3] %vm1575, %v1567
  %1577 = vst.msk [vmem:[#allocation2 + $0x2] sm:$0x3] %vm1575, %v1568
  %1578 = vst.msk [vmem:[#allocation2 + $0x4] sm:$0x3] %vm1575, %v1569
  %1579 = vst.msk [vmem:[#allocation2 + $0x6] sm:$0x3] %vm1575, %v1570
  %1580 = vst.msk [vmem:[#allocation2 + $0x8] sm:$0x3] %vm1575, %v1571
  %1581 = vst.msk [vmem:[#allocation2 + $0xa] sm:$0x3] %vm1575, %v1572
  %1582 = vst.msk [vmem:[#allocation2 + $0xc] sm:$0x3] %vm1575, %v1573
  %1583 = vst.msk [vmem:[#allocation2 + $0xe] sm:$0x3] %vm1575, %v1574
  %v1584 = vld [vmem:[#allocation2] sm:$0x1]
  %v1585 = vld [vmem:[#allocation2 + $0x2] sm:$0x1]
  %v1586 = vld [vmem:[#allocation2 + $0x4] sm:$0x1]
  %v1587 = vld [vmem:[#allocation2 + $0x6] sm:$0x1]
  %v1588 = vld [vmem:[#allocation2 + $0x8] sm:$0x1]
  %v1589 = vld [vmem:[#allocation2 + $0xa] sm:$0x1]
  %v1590 = vld [vmem:[#allocation2 + $0xc] sm:$0x1]
  %v1591 = vld [vmem:[#allocation2 + $0xe] sm:$0x1]
  %v1600 = vrot.slane %v1585, 7
  %vm1601 = vcmask 1041409
  %v1602 = vsel %vm1601, %v1600, %v1584
  %v1603 = vrot.slane %v1586, 6
  %vm1604 = vcmask 1042434
  %v1605 = vsel %vm1604, %v1603, %v1602
  %v1606 = vrot.slane %v1587, 5
  %vm1607 = vcmask 1043459
  %v1608 = vsel %vm1607, %v1606, %v1605
  %v1609 = vrot.slane %v1588, 4
  %vm1610 = vcmask 1044484
  %v1611 = vsel %vm1610, %v1609, %v1608
  %v1612 = vrot.slane %v1589, 3
  %vm1613 = vcmask 1045509
  %v1614 = vsel %vm1613, %v1612, %v1611
  %v1615 = vrot.slane %v1590, 2
  %vm1616 = vcmask 1046534
  %v1617 = vsel %vm1616, %v1615, %v1614
  %v1618 = vrot.slane %v1591, 1
  %vm1619 = vcmask 1047559
  %v1620 = vsel %vm1619, %v1618, %v1617
  %1622 = vst.msk [vmem:[%s4] sm:$0xff] %vm910, %v1620
  %v1623 = vld [vmem:[#allocation2 + $0x1] sm:$0x1]
  %v1624 = vld [vmem:[#allocation2 + $0x3] sm:$0x1]
  %v1625 = vld [vmem:[#allocation2 + $0x5] sm:$0x1]
  %v1626 = vld [vmem:[#allocation2 + $0x7] sm:$0x1]
  %v1627 = vld [vmem:[#allocation2 + $0x9] sm:$0x1]
  %v1628 = vld [vmem:[#allocation2 + $0xb] sm:$0x1]
  %v1629 = vld [vmem:[#allocation2 + $0xd] sm:$0x1]
  %v1630 = vld [vmem:[#allocation2 + $0xf] sm:$0x1]
  %v1639 = vrot.slane %v1624, 7
  %v1640 = vsel %vm1601, %v1639, %v1623
  %v1641 = vrot.slane %v1625, 6
  %v1642 = vsel %vm1604, %v1641, %v1640
  %v1643 = vrot.slane %v1626, 5
  %v1644 = vsel %vm1607, %v1643, %v1642
  %v1645 = vrot.slane %v1627, 4
  %v1646 = vsel %vm1610, %v1645, %v1644
  %v1647 = vrot.slane %v1628, 3
  %v1648 = vsel %vm1613, %v1647, %v1646
  %v1649 = vrot.slane %v1629, 2
  %v1650 = vsel %vm1616, %v1649, %v1648
  %v1651 = vrot.slane %v1630, 1
  %v1652 = vsel %vm1619, %v1651, %v1650
  %s1654 = scalar_lea.vmem %s4, 8
  %1655 = vst.msk [vmem:[%s1654] sm:$0xff] %vm910, %v1652
  // Predicated region
  $region18: #{hebbian_encoder_forward.1} parent=0 // pred_check
    _
  $region19: #{hebbian_encoder_forward.1} parent=0 // pred_check_branch
    %1657 = sbr.rel (0) target = $region21
  $region20: #{hebbian_encoder_forward.1} parent=0 // pred_region
    _
  $region21: #{hebbian_encoder_forward.1} parent=0 // pred_fallthru
    _
  // Predicated region
  $region22: #{hebbian_encoder_forward.1} parent=0 // pred_check
    _
  $region23: #{hebbian_encoder_forward.1} parent=0 // pred_check_branch
    %1659 = sbr.rel (0) target = $region25
  $region24: #{hebbian_encoder_forward.1} parent=0 // pred_region
    _
  $region25: #{hebbian_encoder_forward.1} parent=0 // pred_fallthru
    _
  // Predicated region
  $region26: #{hebbian_encoder_forward.1} parent=0 // pred_check
    _
  $region27: #{hebbian_encoder_forward.1} parent=0 // pred_check_branch
    %1661 = sbr.rel (0) target = $region29
  $region28: #{hebbian_encoder_forward.1} parent=0 // pred_region
    _
  $region29: #{hebbian_encoder_forward.1} parent=0 // pred_fallthru
    _
  // Predicated region
  $region30: #{hebbian_encoder_forward.1} parent=0 // pred_check
    _
  $region31: #{hebbian_encoder_forward.1} parent=0 // pred_check_branch
    %1663 = sbr.rel (0) target = $region33
  $region32: #{hebbian_encoder_forward.1} parent=0 // pred_region
    _
  $region33: #{hebbian_encoder_forward.1} parent=0 // pred_fallthru
    _

</llo_original>
